<compile_context>
chip_gen: v6e
topology: v6e:2x2x1
jax: 0.10.0
libtpu: 0.0.40
codegen_flags: <defaults>
</compile_context>

<pallas_src>
import math
from functools import partial

import jax
import jax.numpy as jnp
from jax import lax
from jax.experimental import pallas as pl
from jax.experimental.pallas import tpu as pltpu


def attn_kernel(q_ref, k_ref, v_ref, mask_ref, o_ref,
                m_sc, l_sc, acc_sc, *, sm_scale):
    # q_ref:    (1, tq, dk)   k_ref: (1, tk, dk)   v_ref: (1, tk, dv)
    # mask_ref: (1, tq, tk)   o_ref: (1, tq, dv)
    # scratch:  m_sc/l_sc (tq, 1) f32, acc_sc (tq, dv) f32
    kv = pl.program_id(2)

    @pl.when(kv == 0)
    def _():
        m_sc[...] = jnp.full_like(m_sc, -jnp.inf)
        l_sc[...] = jnp.zeros_like(l_sc)
        acc_sc[...] = jnp.zeros_like(acc_sc)

    q = q_ref[0]
    k = k_ref[0]
    # scores = Q @ K^T / sqrt(d_k)   (MXU, f32 accumulation)
    s = lax.dot_general(q, k, (((1,), (1,)), ((), ())),
                        preferred_element_type=jnp.float32) * sm_scale
    # PyTorch: scores.masked_fill_(attn_mask, 1e-09)  -- keep the 1e-9 fill exactly.
    s = jnp.where(mask_ref[0] != 0, jnp.float32(1e-9), s)

    # online softmax over the kv axis
    m_prev = m_sc[...]
    m_new = jnp.maximum(m_prev, s.max(axis=-1, keepdims=True))
    alpha = jnp.exp(m_prev - m_new)
    p = jnp.exp(s - m_new)
    l_sc[...] = alpha * l_sc[...] + p.sum(axis=-1, keepdims=True)
    acc_sc[...] = alpha * acc_sc[...] + jnp.dot(
        p.astype(v_ref.dtype), v_ref[0], preferred_element_type=jnp.float32)
    m_sc[...] = m_new

    @pl.when(kv == pl.num_programs(2) - 1)
    def _():
        o_ref[0] = (acc_sc[...] / l_sc[...]).astype(o_ref.dtype)


def scaled_dot_product_attention(Q, K, V, attn_mask, *, tq=128, tk=128):
    """Q,K: (B,H,S,d_k); V: (B,H,S,d_v); attn_mask: bool, broadcastable to (B,H,Sq,Sk)."""
    B, H, Sq, Dk = Q.shape
    _, _, Sk, Dv = V.shape
    assert K.shape == (B, H, Sk, Dk)

    BH = B * H
    tq = min(tq, Sq)
    tk = min(tk, Sk)
    assert Sq % tq == 0 and Sk % tk == 0, "sequence lengths must divide the tiles"

    sm_scale = 1.0 / math.sqrt(Dk)

    q3 = Q.reshape(BH, Sq, Dk)
    k3 = K.reshape(BH, Sk, Dk)
    v3 = V.reshape(BH, Sk, Dv)
    mask3 = jnp.broadcast_to(attn_mask, (B, H, Sq, Sk)).reshape(BH, Sq, Sk)
    mask3 = mask3.astype(jnp.int32)  # int32 block loads (avoid packed-bool layout issues)

    grid = (BH, Sq // tq, Sk // tk)

    itemsize = jnp.dtype(Q.dtype).itemsize
    cost = pl.CostEstimate(
        flops=2 * BH * Sq * Sk * (Dk + Dv),
        transcendentals=BH * Sq * Sk,
        bytes_accessed=(q3.size + k3.size + v3.size + BH * Sq * Dv) * itemsize
                       + mask3.size * 4,
    )

    out = pl.pallas_call(
        partial(attn_kernel, sm_scale=sm_scale),
        out_shape=jax.ShapeDtypeStruct((BH, Sq, Dv), Q.dtype),
        grid_spec=pltpu.PrefetchScalarGridSpec(
            num_scalar_prefetch=0,
            grid=grid,
            in_specs=[
                pl.BlockSpec((1, tq, Dk), lambda b, i, j: (b, i, 0)),   # Q tile
                pl.BlockSpec((1, tk, Dk), lambda b, i, j: (b, j, 0)),   # K tile
                pl.BlockSpec((1, tk, Dv), lambda b, i, j: (b, j, 0)),   # V tile
                pl.BlockSpec((1, tq, tk), lambda b, i, j: (b, i, j)),   # mask tile
            ],
            out_specs=pl.BlockSpec((1, tq, Dv), lambda b, i, j: (b, i, 0)),
            scratch_shapes=[
                pltpu.VMEM((tq, 1), jnp.float32),    # running max
                pltpu.VMEM((tq, 1), jnp.float32),    # running denom
                pltpu.VMEM((tq, Dv), jnp.float32),   # f32 accumulator
            ],
        ),
        compiler_params=pltpu.CompilerParams(
            dimension_semantics=("parallel", "parallel", "arbitrary"),
        ),
        cost_estimate=cost,
    )(q3, k3, v3, mask3)

    return out.reshape(B, H, Sq, Dv)


def reference_attention(Q, K, V, attn_mask):
    d_k = Q.shape[-1]
    scores = jnp.einsum("bhqd,bhkd->bhqk",
                        Q.astype(jnp.float32), K.astype(jnp.float32)) / math.sqrt(d_k)
    scores = jnp.where(attn_mask, jnp.float32(1e-9), scores)
    attn = jax.nn.softmax(scores, axis=-1)
    ctx = jnp.einsum("bhqk,bhkd->bhqd", attn, V.astype(jnp.float32))
    return ctx.astype(Q.dtype)


if __name__ == "__main__":
    # Small but lane-dense shapes: one full 128x128 MXU tile per (batch, head).
    batch, n_heads, seq, d_k = 2, 4, 128, 64

    key = jax.random.PRNGKey(0)
    kq, kk, kv = jax.random.split(key, 3)

    Q = jax.random.normal(kq, (batch, n_heads, seq, d_k), dtype=jnp.float32)
    K = jax.random.normal(kk, (batch, n_heads, seq, d_k), dtype=jnp.float32)
    V = jax.random.normal(kv, (batch, n_heads, seq, d_k), dtype=jnp.float32)

    # Deterministic causal mask (True = masked), broadcast over batch & heads.
    causal = jnp.triu(jnp.ones((seq, seq), dtype=bool), k=1)
    attn_mask = jnp.broadcast_to(causal, (batch, n_heads, seq, seq))

    ctx = scaled_dot_product_attention(Q, K, V, attn_mask)
    jax.block_until_ready(ctx)

    ctx_ref = reference_attention(Q, K, V, attn_mask)
    assert ctx.shape == Q.shape and ctx.dtype == Q.dtype
    assert jnp.allclose(ctx, ctx_ref, atol=1e-5, rtol=1e-5)

    print("KERNEL_OK")
</pallas_src>

<mosaic_0001>
module attributes {stable_mosaic.version = 11 : i64} {
  func.func @attn_kernel(%arg0: i32, %arg1: i32, %arg2: i32, %arg3: memref<1x128x64xf32, #tpu.memory_space<vmem>>, %arg4: memref<1x128x64xf32, #tpu.memory_space<vmem>>, %arg5: memref<1x128x64xf32, #tpu.memory_space<vmem>>, %arg6: memref<1x128x128xi32, #tpu.memory_space<vmem>>, %arg7: memref<1x128x64xf32, #tpu.memory_space<vmem>>, %arg8: memref<128x1xf32, #tpu.memory_space<vmem>>, %arg9: memref<128x1xf32, #tpu.memory_space<vmem>>, %arg10: memref<128x64xf32, #tpu.memory_space<vmem>>) attributes {dimension_semantics = [#tpu.dimension_semantics<parallel>, #tpu.dimension_semantics<parallel>, #tpu.dimension_semantics<arbitrary>], iteration_bounds = array<i64: 8, 1, 1>, scalar_prefetch = 0 : i64, scratch_operands = 3 : i64, tpu.core_type = #tpu.core_type<tc>, window_params = [{transform_indices = @transform_0, window_bounds = array<i64: 1, 128, 64>}, {transform_indices = @transform_1, window_bounds = array<i64: 1, 128, 64>}, {transform_indices = @transform_2, window_bounds = array<i64: 1, 128, 64>}, {transform_indices = @transform_3, window_bounds = array<i64: 1, 128, 128>}, {transform_indices = @transform_4, window_bounds = array<i64: 1, 128, 64>}]} {
    %c0_i32 = arith.constant 0 : i32
    %0 = arith.cmpi eq, %arg2, %c0_i32 : i32
    %1 = arith.extui %0 : i1 to i32
    %c0_i32_0 = arith.constant 0 : i32
    %2 = arith.cmpi ne, %1, %c0_i32_0 : i32
    scf.if %2 {
      %cst_32 = arith.constant 0xFF800000 : f32
      %43 = vector.broadcast %cst_32 : f32 to vector<128x1xf32>
      %c0_33 = arith.constant 0 : index
      %c0_34 = arith.constant 0 : index
      %44 = vector.load %arg8[%c0_33, %c0_34] : memref<128x1xf32, #tpu.memory_space<vmem>>, vector<128x1xf32>
      tpu.vector_store %arg8[%c0_33, %c0_34], %43 {strides = array<i32>} : memref<128x1xf32, #tpu.memory_space<vmem>>, vector<128x1xf32>,
      %cst_35 = arith.constant 0.000000e+00 : f32
      %45 = vector.broadcast %cst_35 : f32 to vector<128x1xf32>
      %c0_36 = arith.constant 0 : index
      %c0_37 = arith.constant 0 : index
      %46 = vector.load %arg9[%c0_36, %c0_37] : memref<128x1xf32, #tpu.memory_space<vmem>>, vector<128x1xf32>
      tpu.vector_store %arg9[%c0_36, %c0_37], %45 {strides = array<i32>} : memref<128x1xf32, #tpu.memory_space<vmem>>, vector<128x1xf32>,
      %cst_38 = arith.constant 0.000000e+00 : f32
      %47 = vector.broadcast %cst_38 : f32 to vector<128x64xf32>
      %c0_39 = arith.constant 0 : index
      %c0_40 = arith.constant 0 : index
      %48 = vector.load %arg10[%c0_39, %c0_40] : memref<128x64xf32, #tpu.memory_space<vmem>>, vector<128x64xf32>
      tpu.vector_store %arg10[%c0_39, %c0_40], %47 {strides = array<i32>} : memref<128x64xf32, #tpu.memory_space<vmem>>, vector<128x64xf32>,
    } else {
    }
    %c0 = arith.constant 0 : index
    %c0_1 = arith.constant 0 : index
    %c0_2 = arith.constant 0 : index
    %3 = vector.load %arg3[%c0, %c0_1, %c0_2] : memref<1x128x64xf32, #tpu.memory_space<vmem>>, vector<1x128x64xf32>
    %4 = vector.shape_cast %3 : vector<1x128x64xf32> to vector<128x64xf32>
    %c0_3 = arith.constant 0 : index
    %c0_4 = arith.constant 0 : index
    %c0_5 = arith.constant 0 : index
    %5 = vector.load %arg4[%c0_3, %c0_4, %c0_5] : memref<1x128x64xf32, #tpu.memory_space<vmem>>, vector<1x128x64xf32>
    %6 = vector.shape_cast %5 : vector<1x128x64xf32> to vector<128x64xf32>
    %cst = arith.constant dense<0.000000e+00> : vector<128x128xf32>
    %7 = tpu.matmul %4, %6, %cst {dimension_numbers = #tpu.dot_dimension_numbers<[1], [1], [0], [0], [0, 0, 1, 0], [], []>} : vector<128x64xf32>, vector<128x64xf32>, vector<128x128xf32> -> vector<128x128xf32>
    %cst_6 = arith.constant 1.250000e-01 : f32
    %8 = vector.broadcast %cst_6 : f32 to vector<128x128xf32>
    %9 = arith.mulf %7, %8 : vector<128x128xf32>
    %c0_7 = arith.constant 0 : index
    %c0_8 = arith.constant 0 : index
    %c0_9 = arith.constant 0 : index
    %10 = vector.load %arg6[%c0_7, %c0_8, %c0_9] : memref<1x128x128xi32, #tpu.memory_space<vmem>>, vector<1x128x128xi32>
    %11 = vector.shape_cast %10 : vector<1x128x128xi32> to vector<128x128xi32>
    %c0_i32_10 = arith.constant 0 : i32
    %12 = vector.broadcast %c0_i32_10 : i32 to vector<128x128xi32>
    %13 = arith.cmpi ne, %11, %12 : vector<128x128xi32>
    %cst_11 = arith.constant 9.99999971E-10 : f32
    %14 = vector.broadcast %cst_11 : f32 to vector<128x128xf32>
    %15 = arith.select %13, %14, %9 : vector<128x128xi1>, vector<128x128xf32>
    %c0_12 = arith.constant 0 : index
    %c0_13 = arith.constant 0 : index
    %16 = vector.load %arg8[%c0_12, %c0_13] : memref<128x1xf32, #tpu.memory_space<vmem>>, vector<128x1xf32>
    %cst_14 = arith.constant dense<0xFF800000> : vector<128xf32>
    %17 = vector.multi_reduction <maximumf>, %15, %cst_14 [1] : vector<128x128xf32> to vector<128xf32>
    %18 = vector.shape_cast %17 : vector<128xf32> to vector<128x1xf32>
    %19 = arith.maximumf %16, %18 : vector<128x1xf32>
    %20 = arith.subf %16, %19 : vector<128x1xf32>
    %21 = math.exp %20 : vector<128x1xf32>
    %22 = vector.broadcast %19 : vector<128x1xf32> to vector<128x128xf32>
    %23 = arith.subf %15, %22 : vector<128x128xf32>
    %24 = math.exp %23 : vector<128x128xf32>
    %c0_15 = arith.constant 0 : index
    %c0_16 = arith.constant 0 : index
    %25 = vector.load %arg9[%c0_15, %c0_16] : memref<128x1xf32, #tpu.memory_space<vmem>>, vector<128x1xf32>
    %26 = arith.mulf %21, %25 : vector<128x1xf32>
    %cst_17 = arith.constant dense<0.000000e+00> : vector<128xf32>
    %27 = vector.multi_reduction <add>, %24, %cst_17 [1] : vector<128x128xf32> to vector<128xf32>
    %28 = vector.shape_cast %27 : vector<128xf32> to vector<128x1xf32>
    %29 = arith.addf %26, %28 : vector<128x1xf32>
    %c0_18 = arith.constant 0 : index
    %c0_19 = arith.constant 0 : index
    %30 = vector.load %arg9[%c0_18, %c0_19] : memref<128x1xf32, #tpu.memory_space<vmem>>, vector<128x1xf32>
    tpu.vector_store %arg9[%c0_18, %c0_19], %29 {strides = array<i32>} : memref<128x1xf32, #tpu.memory_space<vmem>>, vector<128x1xf32>,
    %c0_20 = arith.constant 0 : index
    %c0_21 = arith.constant 0 : index
    %31 = vector.load %arg10[%c0_20, %c0_21] : memref<128x64xf32, #tpu.memory_space<vmem>>, vector<128x64xf32>
    %32 = vector.broadcast %21 : vector<128x1xf32> to vector<128x64xf32>
    %33 = arith.mulf %32, %31 : vector<128x64xf32>
    %c0_22 = arith.constant 0 : index
    %c0_23 = arith.constant 0 : index
    %c0_24 = arith.constant 0 : index
    %34 = vector.load %arg5[%c0_22, %c0_23, %c0_24] : memref<1x128x64xf32, #tpu.memory_space<vmem>>, vector<1x128x64xf32>
    %35 = vector.shape_cast %34 : vector<1x128x64xf32> to vector<128x64xf32>
    %cst_25 = arith.constant dense<0.000000e+00> : vector<128x64xf32>
    %36 = tpu.matmul %24, %35, %cst_25 {dimension_numbers = #tpu.dot_dimension_numbers<[1], [0], [0], [1], [0, 0, 1, 1], [], []>} : vector<128x128xf32>, vector<128x64xf32>, vector<128x64xf32> -> vector<128x64xf32>
    %37 = arith.addf %33, %36 : vector<128x64xf32>
    %c0_26 = arith.constant 0 : index
    %c0_27 = arith.constant 0 : index
    %38 = vector.load %arg10[%c0_26, %c0_27] : memref<128x64xf32, #tpu.memory_space<vmem>>, vector<128x64xf32>
    tpu.vector_store %arg10[%c0_26, %c0_27], %37 {strides = array<i32>} : memref<128x64xf32, #tpu.memory_space<vmem>>, vector<128x64xf32>,
    %c0_28 = arith.constant 0 : index
    %c0_29 = arith.constant 0 : index
    %39 = vector.load %arg8[%c0_28, %c0_29] : memref<128x1xf32, #tpu.memory_space<vmem>>, vector<128x1xf32>
    tpu.vector_store %arg8[%c0_28, %c0_29], %19 {strides = array<i32>} : memref<128x1xf32, #tpu.memory_space<vmem>>, vector<128x1xf32>,
    %c0_i32_30 = arith.constant 0 : i32
    %40 = arith.cmpi eq, %arg2, %c0_i32_30 : i32
    %41 = arith.extui %40 : i1 to i32
    %c0_i32_31 = arith.constant 0 : i32
    %42 = arith.cmpi ne, %41, %c0_i32_31 : i32
    scf.if %42 {
      %c0_32 = arith.constant 0 : index
      %c0_33 = arith.constant 0 : index
      %43 = vector.load %arg10[%c0_32, %c0_33] : memref<128x64xf32, #tpu.memory_space<vmem>>, vector<128x64xf32>
      %c0_34 = arith.constant 0 : index
      %c0_35 = arith.constant 0 : index
      %44 = vector.load %arg9[%c0_34, %c0_35] : memref<128x1xf32, #tpu.memory_space<vmem>>, vector<128x1xf32>
      %45 = vector.broadcast %44 : vector<128x1xf32> to vector<128x64xf32>
      %46 = arith.divf %43, %45 : vector<128x64xf32>
      %c0_36 = arith.constant 0 : index
      %c0_37 = arith.constant 0 : index
      %c0_38 = arith.constant 0 : index
      %47 = vector.load %arg7[%c0_36, %c0_37, %c0_38] : memref<1x128x64xf32, #tpu.memory_space<vmem>>, vector<1x128x64xf32>
      %48 = vector.shape_cast %47 : vector<1x128x64xf32> to vector<128x64xf32>
      %49 = vector.shape_cast %46 : vector<128x64xf32> to vector<1x128x64xf32>
      tpu.vector_store %arg7[%c0_36, %c0_37, %c0_38], %49 {strides = array<i32>} : memref<1x128x64xf32, #tpu.memory_space<vmem>>, vector<1x128x64xf32>,
    } else {
    }
    return
  }
  func.func @transform_0(%arg0: i32, %arg1: i32, %arg2: i32) -> (i32, i32, i32) {
    %c0_i32 = arith.constant 0 : i32
    %c0_i32_0 = arith.constant 0 : i32
    return %arg0, %arg1, %c0_i32 : i32, i32, i32
  }
  func.func @transform_1(%arg0: i32, %arg1: i32, %arg2: i32) -> (i32, i32, i32) {
    %c0_i32 = arith.constant 0 : i32
    %c0_i32_0 = arith.constant 0 : i32
    return %arg0, %arg2, %c0_i32 : i32, i32, i32
  }
  func.func @transform_2(%arg0: i32, %arg1: i32, %arg2: i32) -> (i32, i32, i32) {
    %c0_i32 = arith.constant 0 : i32
    %c0_i32_0 = arith.constant 0 : i32
    return %arg0, %arg2, %c0_i32 : i32, i32, i32
  }
  func.func @transform_3(%arg0: i32, %arg1: i32, %arg2: i32) -> (i32, i32, i32) {
    %c0_i32 = arith.constant 0 : i32
    return %arg0, %arg1, %arg2 : i32, i32, i32
  }
  func.func @transform_4(%arg0: i32, %arg1: i32, %arg2: i32) -> (i32, i32, i32) {
    %c0_i32 = arith.constant 0 : i32
    %c0_i32_0 = arith.constant 0 : i32
    return %arg0, %arg1, %c0_i32 : i32, i32, i32
  }
}

</mosaic_0001>

<llo_original>
// kernel: tpu_custom_call.1
$region0: #{tpu_custom_call.1}
  #allocation0 [shape = 'u32[]', space=smem, size = 0x4, offset = 0x4, fixed_abs, tag = 'smem constant byte address 0x4 - core index']
  #allocation1 [shape = 'u32[144,128]{1,0:T(1,128)}', space=vmem, size = 0x12000, scoped, tag = 'internal scratch']
  #allocation2 [shape = 'f32[128,1]{1,0:T(8,128)}', space=vmem, size = 0x10000, scoped, tag = 'scratch operand']
  #allocation3 [shape = 'f32[128,1]{1,0:T(8,128)}', space=vmem, size = 0x10000, scoped, tag = 'scratch operand']
  #allocation4 [shape = 'f32[128,64]{1,0:T(8,128)}', space=vmem, size = 0x10000, scoped, tag = 'scratch operand']
  %s0 = inlined_call_operand.vmem [shape: f32[8,128,64], index: 0, kind: input, shape index: {}]
  %s1 = inlined_call_operand.vmem [shape: f32[8,128,64], index: 1, kind: input, shape index: {}]
  %s2 = inlined_call_operand.vmem [shape: f32[8,128,64], index: 2, kind: input, shape index: {}]
  %s3 = inlined_call_operand.vmem [shape: s32[8,128,128], index: 3, kind: input, shape index: {}]
  %s4 = inlined_call_operand.vmem [shape: f32[8,128,64], index: 4, kind: output, shape index: {}]
  %s5 = sld [smem:[#allocation0]]
  $region57: #{tpu_custom_call.1} parent=0
    _
  %s7 = ssub.s32 1, %s5
  %s8 = scalar_select 0, %s7, %s5
  loop: start=0, step=1, limit=10
  $region2: #{tpu_custom_call.1} parent=0 // loop_pre_header
    _
  $region3: #{tpu_custom_call.1} parent=0 // loop_header
    %s10 = sphi 0, %s14
    %p11 = scmp.ge.s32.totalorder %s10, 10
    %s17 = sphi 0, %s36
    %s18 = sphi 0, %s32
    %s19 = sphi 0, %s28
    %s20 = sphi 0, %s17
    %s21 = sphi 0, %s18
    %s22 = sphi 0, %s19
    %s23 = sphi 0, %s20
    %s24 = sphi 0, %s21
    %s25 = sphi 0, %s22
    %s41 = sphi 0, %s43
    %s44 = sphi 0, %s41
    %s45 = sphi 0, %s44
    %s61 = sphi 0, %s45
    %s69 = sphi 0, %s71
    %s72 = sphi 0, %s69
    %s73 = sphi 0, %s72
    %s89 = sphi 0, %s73
    %s97 = sphi 0, %s99
    %s100 = sphi 0, %s97
    %s101 = sphi 0, %s100
    %s117 = sphi 0, %s101
    %s127 = sphi 0, %s129
    %s130 = sphi 0, %s127
    %s131 = sphi 0, %s130
    %s147 = sphi 0, %s131
    %s155 = sphi 0, %s157
    %s158 = sphi 0, %s155
    %s159 = sphi 0, %s158
    %s175 = sphi 0, %s159
  $region4: #{tpu_custom_call.1} parent=0 // loop_header_branch
    %13 = sbr.rel (%p11) target = $region8
  $region5: #{tpu_custom_call.1} parent=0 // loop_body
    %s15 = ssub.s32 %s10, 1
    %s16 = ssub.s32 %s10, 2
    %s26 = sadd.s32 1, %s19
    %p27 = scmp.ge.s32.totalorder %s26, 1
    %s28 = scalar_select %p27, 0, %s26
    %s29 = sadd.s32 1, %s18
    %s30 = scalar_select %p27, %s29, %s18
    %p31 = scmp.ge.s32.totalorder %s30, 1
    %s32 = scalar_select %p31, 0, %s30
    %s33 = sadd.s32 1, %s17
    %s34 = scalar_select %p31, %s33, %s17
    %p35 = scmp.ge.s32.totalorder %s34, 8
    %s36 = scalar_select %p35, 0, %s34
    %s37 = ssub.s32 %s17, %s36
    %s38 = ssub.s32 %s18, %s32
    %s39 = sor.u32 %s37, %s38
    %p40 = scmp.eq.s32.totalorder %s39, 0
    %s42 = sadd.s32 %s41, 1
    %s43 = scalar_select %p40, %s41, %s42
    %p46 = pneg %p40
    %p47 = scmp.eq.s32.totalorder %s10, 7
    %p48 = por %p46, %p47
    %p49 = scmp.ne.s32.totalorder %s41, %s44
    %p50 = scmp.eq.s32.totalorder %s10, 0
    %p51 = por %p49, %p50
    %p52 = scmp.ne.s32.totalorder %s41, %s44
    %p53 = scmp.eq.s32.totalorder %s15, 7
    %p54 = por %p52, %p53
    %p55 = scmp.ne.s32.totalorder %s44, %s45
    %p56 = scmp.eq.s32.totalorder %s15, 0
    %p57 = por %p55, %p56
    %p58 = scmp.ne.s32.totalorder %s44, %s45
    %p59 = scmp.eq.s32.totalorder %s16, 7
    %p60 = por %p58, %p59
    %p62 = scmp.ne.s32.totalorder %s45, %s61
    %p63 = scmp.eq.s32.totalorder %s16, 0
    %p64 = por %p62, %p63
    %s65 = ssub.s32 %s17, %s36
    %s66 = ssub.s32 %s19, %s28
    %s67 = sor.u32 %s65, %s66
    %p68 = scmp.eq.s32.totalorder %s67, 0
    %s70 = sadd.s32 %s69, 1
    %s71 = scalar_select %p68, %s69, %s70
    %p74 = pneg %p68
    %p75 = scmp.eq.s32.totalorder %s10, 7
    %p76 = por %p74, %p75
    %p77 = scmp.ne.s32.totalorder %s69, %s72
    %p78 = scmp.eq.s32.totalorder %s10, 0
    %p79 = por %p77, %p78
    %p80 = scmp.ne.s32.totalorder %s69, %s72
    %p81 = scmp.eq.s32.totalorder %s15, 7
    %p82 = por %p80, %p81
    %p83 = scmp.ne.s32.totalorder %s72, %s73
    %p84 = scmp.eq.s32.totalorder %s15, 0
    %p85 = por %p83, %p84
    %p86 = scmp.ne.s32.totalorder %s72, %s73
    %p87 = scmp.eq.s32.totalorder %s16, 7
    %p88 = por %p86, %p87
    %p90 = scmp.ne.s32.totalorder %s73, %s89
    %p91 = scmp.eq.s32.totalorder %s16, 0
    %p92 = por %p90, %p91
    %s93 = ssub.s32 %s17, %s36
    %s94 = ssub.s32 %s19, %s28
    %s95 = sor.u32 %s93, %s94
    %p96 = scmp.eq.s32.totalorder %s95, 0
    %s98 = sadd.s32 %s97, 1
    %s99 = scalar_select %p96, %s97, %s98
    %p102 = pneg %p96
    %p103 = scmp.eq.s32.totalorder %s10, 7
    %p104 = por %p102, %p103
    %p105 = scmp.ne.s32.totalorder %s97, %s100
    %p106 = scmp.eq.s32.totalorder %s10, 0
    %p107 = por %p105, %p106
    %p108 = scmp.ne.s32.totalorder %s97, %s100
    %p109 = scmp.eq.s32.totalorder %s15, 7
    %p110 = por %p108, %p109
    %p111 = scmp.ne.s32.totalorder %s100, %s101
    %p112 = scmp.eq.s32.totalorder %s15, 0
    %p113 = por %p111, %p112
    %p114 = scmp.ne.s32.totalorder %s100, %s101
    %p115 = scmp.eq.s32.totalorder %s16, 7
    %p116 = por %p114, %p115
    %p118 = scmp.ne.s32.totalorder %s101, %s117
    %p119 = scmp.eq.s32.totalorder %s16, 0
    %p120 = por %p118, %p119
    %s121 = ssub.s32 %s17, %s36
    %s122 = ssub.s32 %s18, %s32
    %s123 = sor.u32 %s121, %s122
    %s124 = ssub.s32 %s19, %s28
    %s125 = sor.u32 %s123, %s124
    %p126 = scmp.eq.s32.totalorder %s125, 0
    %s128 = sadd.s32 %s127, 1
    %s129 = scalar_select %p126, %s127, %s128
    %p132 = pneg %p126
    %p133 = scmp.eq.s32.totalorder %s10, 7
    %p134 = por %p132, %p133
    %p135 = scmp.ne.s32.totalorder %s127, %s130
    %p136 = scmp.eq.s32.totalorder %s10, 0
    %p137 = por %p135, %p136
    %p138 = scmp.ne.s32.totalorder %s127, %s130
    %p139 = scmp.eq.s32.totalorder %s15, 7
    %p140 = por %p138, %p139
    %p141 = scmp.ne.s32.totalorder %s130, %s131
    %p142 = scmp.eq.s32.totalorder %s15, 0
    %p143 = por %p141, %p142
    %p144 = scmp.ne.s32.totalorder %s130, %s131
    %p145 = scmp.eq.s32.totalorder %s16, 7
    %p146 = por %p144, %p145
    %p148 = scmp.ne.s32.totalorder %s131, %s147
    %p149 = scmp.eq.s32.totalorder %s16, 0
    %p150 = por %p148, %p149
    %s151 = ssub.s32 %s17, %s36
    %s152 = ssub.s32 %s18, %s32
    %s153 = sor.u32 %s151, %s152
    %p154 = scmp.eq.s32.totalorder %s153, 0
    %s156 = sadd.s32 %s155, 1
    %s157 = scalar_select %p154, %s155, %s156
    %p160 = pneg %p154
    %p161 = scmp.eq.s32.totalorder %s10, 7
    %p162 = por %p160, %p161
    %p163 = scmp.ne.s32.totalorder %s155, %s158
    %p164 = scmp.eq.s32.totalorder %s10, 0
    %p165 = por %p163, %p164
    %p166 = scmp.ne.s32.totalorder %s155, %s158
    %p167 = scmp.eq.s32.totalorder %s15, 7
    %p168 = por %p166, %p167
    %p169 = scmp.ne.s32.totalorder %s158, %s159
    %p170 = scmp.eq.s32.totalorder %s15, 0
    %p171 = por %p169, %p170
    %p172 = scmp.ne.s32.totalorder %s158, %s159
    %p173 = scmp.eq.s32.totalorder %s16, 7
    %p174 = por %p172, %p173
    %p176 = scmp.ne.s32.totalorder %s159, %s175
    %p177 = scmp.eq.s32.totalorder %s16, 0
    %p178 = por %p176, %p177
    %p179 = scmp.le.s32.totalorder 1, %s10
    %p180 = scmp.lt.s32.totalorder %s10, 9
    %p181 = pnand %p179, %p180
    %p182 = pneg %p181
    // Predicated region
    $region9: #{tpu_custom_call.1} parent=5 // pred_check
      _
    $region10: #{tpu_custom_call.1} parent=5 // pred_check_branch
      %184 = sbr.rel (%p181) target = $region12
    $region11: #{tpu_custom_call.1} parent=5 // pred_region
      %s185 = ssub.s32 %s10, 1
    $region12: #{tpu_custom_call.1} parent=5 // pred_fallthru
      _
    %p186 = scmp.lt.s32.totalorder %s10, 8
    // Predicated region
    $region13: #{tpu_custom_call.1} parent=5 // pred_check
      %p187 = pneg %p186
    $region14: #{tpu_custom_call.1} parent=5 // pred_check_branch
      %189 = sbr.rel (%p187) target = $region16
    $region15: #{tpu_custom_call.1} parent=5 // pred_region
      // Predicated region
      $region17: #{tpu_custom_call.1} parent=15 // pred_check
        %p190 = pneg %p51
      $region18: #{tpu_custom_call.1} parent=15 // pred_check_branch
        %192 = sbr.rel (%p190) target = $region20
      $region19: #{tpu_custom_call.1} parent=15 // pred_region
        %s193 = smul.u32 16, %s18
        %p194 = scmp.lt.s32.totalorder %s17, 7
        %s195 = scalar_select %p194, %s17, 7
        %p196 = scmp.lt.s32.totalorder %s193, 15
        %s197 = scalar_select %p196, %s193, 15
        %s198 = smul.addr %s195, 16
        %s199 = sadd.s32 %s197, %s198
        %s200 = smul.addr %s199, 8
        %s201 = scalar_lea.vmem %s0, %s200
        %s202 = smul.u32 16, %s18
      $region20: #{tpu_custom_call.1} parent=15 // pred_fallthru
        _
      // Predicated region
      $region21: #{tpu_custom_call.1} parent=15 // pred_check
        %p203 = pneg %p79
      $region22: #{tpu_custom_call.1} parent=15 // pred_check_branch
        %205 = sbr.rel (%p203) target = $region24
      $region23: #{tpu_custom_call.1} parent=15 // pred_region
        %s206 = smul.u32 16, %s19
        %p207 = scmp.lt.s32.totalorder %s17, 7
        %s208 = scalar_select %p207, %s17, 7
        %p209 = scmp.lt.s32.totalorder %s206, 15
        %s210 = scalar_select %p209, %s206, 15
        %s211 = smul.addr %s208, 16
        %s212 = sadd.s32 %s210, %s211
        %s213 = smul.addr %s212, 8
        %s214 = scalar_lea.vmem %s1, %s213
        %s215 = smul.u32 16, %s19
      $region24: #{tpu_custom_call.1} parent=15 // pred_fallthru
        _
      // Predicated region
      $region25: #{tpu_custom_call.1} parent=15 // pred_check
        %p216 = pneg %p107
      $region26: #{tpu_custom_call.1} parent=15 // pred_check_branch
        %218 = sbr.rel (%p216) target = $region28
      $region27: #{tpu_custom_call.1} parent=15 // pred_region
        %s219 = smul.u32 16, %s19
        %p220 = scmp.lt.s32.totalorder %s17, 7
        %s221 = scalar_select %p220, %s17, 7
        %p222 = scmp.lt.s32.totalorder %s219, 15
        %s223 = scalar_select %p222, %s219, 15
        %s224 = smul.addr %s221, 16
        %s225 = sadd.s32 %s223, %s224
        %s226 = smul.addr %s225, 8
        %s227 = scalar_lea.vmem %s2, %s226
        %s228 = smul.u32 16, %s19
      $region28: #{tpu_custom_call.1} parent=15 // pred_fallthru
        _
      // Predicated region
      $region29: #{tpu_custom_call.1} parent=15 // pred_check
        %p229 = pneg %p137
      $region30: #{tpu_custom_call.1} parent=15 // pred_check_branch
        %231 = sbr.rel (%p229) target = $region32
      $region31: #{tpu_custom_call.1} parent=15 // pred_region
        %s232 = smul.u32 16, %s18
        %p233 = scmp.lt.s32.totalorder %s17, 7
        %s234 = scalar_select %p233, %s17, 7
        %p235 = scmp.lt.s32.totalorder %s232, 15
        %s236 = scalar_select %p235, %s232, 15
        %p237 = scmp.lt.s32.totalorder %s19, 0
        %s238 = scalar_select %p237, %s19, 0
        %s239 = sadd.s32 %s238, %s236
        %s240 = smul.addr %s234, 16
        %s241 = sadd.s32 %s239, %s240
        %s242 = smul.addr %s241, 8
        %s243 = scalar_lea.vmem %s3, %s242
        %s244 = smul.u32 16, %s18
      $region32: #{tpu_custom_call.1} parent=15 // pred_fallthru
        _
    $region16: #{tpu_custom_call.1} parent=5 // pred_fallthru
      _
    %p245 = scmp.le.s32.totalorder 1, %s10
    %p246 = scmp.lt.s32.totalorder %s10, 9
    %p247 = pnand %p245, %p246
    %p248 = pneg %p247
    // Predicated region
    $region33: #{tpu_custom_call.1} parent=5 // pred_check
      _
    $region34: #{tpu_custom_call.1} parent=5 // pred_check_branch
      %250 = sbr.rel (%p247) target = $region36
    $region35: #{tpu_custom_call.1} parent=5 // pred_region
      %s251 = ssub.s32 %s10, 1
      %s252 = smul.u32 16, %s21
      %p253 = scmp.lt.s32.totalorder %s20, 7
      %s254 = scalar_select %p253, %s20, 7
      %p255 = scmp.lt.s32.totalorder %s252, 15
      %s256 = scalar_select %p255, %s252, 15
      %s257 = smul.addr %s254, 16
      %s258 = sadd.s32 %s256, %s257
      %s259 = smul.addr %s258, 8
      %s260 = scalar_lea.vmem %s0, %s259
      %p261 = pneg %p57
      %p262 = pneg %p54
      %s263 = smul.u32 16, %s22
      %p264 = scmp.lt.s32.totalorder %s20, 7
      %s265 = scalar_select %p264, %s20, 7
      %p266 = scmp.lt.s32.totalorder %s263, 15
      %s267 = scalar_select %p266, %s263, 15
      %s268 = smul.addr %s265, 16
      %s269 = sadd.s32 %s267, %s268
      %s270 = smul.addr %s269, 8
      %s271 = scalar_lea.vmem %s1, %s270
      %p272 = pneg %p85
      %p273 = pneg %p82
      %s274 = smul.u32 16, %s22
      %p275 = scmp.lt.s32.totalorder %s20, 7
      %s276 = scalar_select %p275, %s20, 7
      %p277 = scmp.lt.s32.totalorder %s274, 15
      %s278 = scalar_select %p277, %s274, 15
      %s279 = smul.addr %s276, 16
      %s280 = sadd.s32 %s278, %s279
      %s281 = smul.addr %s280, 8
      %s282 = scalar_lea.vmem %s2, %s281
      %p283 = pneg %p113
      %p284 = pneg %p110
      %s285 = smul.u32 16, %s21
      %p286 = scmp.lt.s32.totalorder %s20, 7
      %s287 = scalar_select %p286, %s20, 7
      %p288 = scmp.lt.s32.totalorder %s285, 15
      %s289 = scalar_select %p288, %s285, 15
      %p290 = scmp.lt.s32.totalorder %s22, 0
      %s291 = scalar_select %p290, %s22, 0
      %s292 = sadd.s32 %s291, %s289
      %s293 = smul.addr %s287, 16
      %s294 = sadd.s32 %s292, %s293
      %s295 = smul.addr %s294, 8
      %s296 = scalar_lea.vmem %s3, %s295
      %p297 = pneg %p143
      %p298 = pneg %p140
      %p299 = pneg %p171
      %p300 = pneg %p168
      %s301 = smul.u32 16, %s21
      %p302 = scmp.lt.s32.totalorder %s20, 7
      %s303 = scalar_select %p302, %s20, 7
      %p304 = scmp.lt.s32.totalorder %s301, 15
      %s305 = scalar_select %p304, %s301, 15
      %s306 = smul.addr %s303, 16
      %s307 = sadd.s32 %s305, %s306
      %s308 = smul.addr %s307, 8
      %s309 = scalar_lea.vmem %s4, %s308
      %s310 = smul.u32 16, %s21
      %p311 = scmp.lt.s32.totalorder %s20, 7
      %s312 = scalar_select %p311, %s20, 7
      %p313 = scmp.lt.s32.totalorder %s310, 15
      %s314 = scalar_select %p313, %s310, 15
      %s315 = smul.addr %s312, 16
      %s316 = sadd.s32 %s314, %s315
      %s317 = smul.addr %s316, 8
      %s318 = scalar_lea.vmem %s0, %s317
      %s319 = smul.u32 16, %s21
      %s320 = smul.u32 16, %s22
      %p321 = scmp.lt.s32.totalorder %s20, 7
      %s322 = scalar_select %p321, %s20, 7
      %p323 = scmp.lt.s32.totalorder %s320, 15
      %s324 = scalar_select %p323, %s320, 15
      %s325 = smul.addr %s322, 16
      %s326 = sadd.s32 %s324, %s325
      %s327 = smul.addr %s326, 8
      %s328 = scalar_lea.vmem %s1, %s327
      %s329 = smul.u32 16, %s22
      %s330 = smul.u32 16, %s22
      %p331 = scmp.lt.s32.totalorder %s20, 7
      %s332 = scalar_select %p331, %s20, 7
      %p333 = scmp.lt.s32.totalorder %s330, 15
      %s334 = scalar_select %p333, %s330, 15
      %s335 = smul.addr %s332, 16
      %s336 = sadd.s32 %s334, %s335
      %s337 = smul.addr %s336, 8
      %s338 = scalar_lea.vmem %s2, %s337
      %s339 = smul.u32 16, %s22
      %s340 = smul.u32 16, %s21
      %p341 = scmp.lt.s32.totalorder %s20, 7
      %s342 = scalar_select %p341, %s20, 7
      %p343 = scmp.lt.s32.totalorder %s340, 15
      %s344 = scalar_select %p343, %s340, 15
      %p345 = scmp.lt.s32.totalorder %s22, 0
      %s346 = scalar_select %p345, %s22, 0
      %s347 = sadd.s32 %s346, %s344
      %s348 = smul.addr %s342, 16
      %s349 = sadd.s32 %s347, %s348
      %s350 = smul.addr %s349, 8
      %s351 = scalar_lea.vmem %s3, %s350
      %s352 = smul.u32 16, %s21
      %s353 = smul.u32 16, %s21
      %p354 = scmp.lt.s32.totalorder %s20, 7
      %s355 = scalar_select %p354, %s20, 7
      %p356 = scmp.lt.s32.totalorder %s353, 15
      %s357 = scalar_select %p356, %s353, 15
      %s358 = smul.addr %s355, 16
      %s359 = sadd.s32 %s357, %s358
      %s360 = smul.addr %s359, 8
      %s361 = scalar_lea.vmem %s4, %s360
      %s362 = smul.u32 16, %s21
      %p363 = scmp.eq.s32.totalorder %s22, 0
      // Predicated region
      $region37: #{tpu_custom_call.1} parent=35 // pred_check
        %p364 = pneg %p363
      $region38: #{tpu_custom_call.1} parent=35 // pred_check_branch
        %366 = sbr.rel (%p364) target = $region40
      $region39: #{tpu_custom_call.1} parent=35 // pred_region
        %vm367 = vcmask 7168
        %368 = vst.msk [vmem:[#allocation2] sm:$0xff] %vm367, -inf
        %369 = vst.msk [vmem:[#allocation2 + $0x8] sm:$0xff] %vm367, -inf
        %370 = vst.msk [vmem:[#allocation2 + $0x10] sm:$0xff] %vm367, -inf
        %371 = vst.msk [vmem:[#allocation2 + $0x18] sm:$0xff] %vm367, -inf
        %372 = vst.msk [vmem:[#allocation2 + $0x20] sm:$0xff] %vm367, -inf
        %373 = vst.msk [vmem:[#allocation2 + $0x28] sm:$0xff] %vm367, -inf
        %374 = vst.msk [vmem:[#allocation2 + $0x30] sm:$0xff] %vm367, -inf
        %375 = vst.msk [vmem:[#allocation2 + $0x38] sm:$0xff] %vm367, -inf
        %376 = vst.msk [vmem:[#allocation2 + $0x40] sm:$0xff] %vm367, -inf
        %377 = vst.msk [vmem:[#allocation2 + $0x48] sm:$0xff] %vm367, -inf
        %378 = vst.msk [vmem:[#allocation2 + $0x50] sm:$0xff] %vm367, -inf
        %379 = vst.msk [vmem:[#allocation2 + $0x58] sm:$0xff] %vm367, -inf
        %380 = vst.msk [vmem:[#allocation2 + $0x60] sm:$0xff] %vm367, -inf
        %381 = vst.msk [vmem:[#allocation2 + $0x68] sm:$0xff] %vm367, -inf
        %382 = vst.msk [vmem:[#allocation2 + $0x70] sm:$0xff] %vm367, -inf
        %383 = vst.msk [vmem:[#allocation2 + $0x78] sm:$0xff] %vm367, -inf
        %384 = vst.msk [vmem:[#allocation3] sm:$0xff] %vm367, 0.0
        %385 = vst.msk [vmem:[#allocation3 + $0x8] sm:$0xff] %vm367, 0.0
        %386 = vst.msk [vmem:[#allocation3 + $0x10] sm:$0xff] %vm367, 0.0
        %387 = vst.msk [vmem:[#allocation3 + $0x18] sm:$0xff] %vm367, 0.0
        %388 = vst.msk [vmem:[#allocation3 + $0x20] sm:$0xff] %vm367, 0.0
        %389 = vst.msk [vmem:[#allocation3 + $0x28] sm:$0xff] %vm367, 0.0
        %390 = vst.msk [vmem:[#allocation3 + $0x30] sm:$0xff] %vm367, 0.0
        %391 = vst.msk [vmem:[#allocation3 + $0x38] sm:$0xff] %vm367, 0.0
        %392 = vst.msk [vmem:[#allocation3 + $0x40] sm:$0xff] %vm367, 0.0
        %393 = vst.msk [vmem:[#allocation3 + $0x48] sm:$0xff] %vm367, 0.0
        %394 = vst.msk [vmem:[#allocation3 + $0x50] sm:$0xff] %vm367, 0.0
        %395 = vst.msk [vmem:[#allocation3 + $0x58] sm:$0xff] %vm367, 0.0
        %396 = vst.msk [vmem:[#allocation3 + $0x60] sm:$0xff] %vm367, 0.0
        %397 = vst.msk [vmem:[#allocation3 + $0x68] sm:$0xff] %vm367, 0.0
        %398 = vst.msk [vmem:[#allocation3 + $0x70] sm:$0xff] %vm367, 0.0
        %399 = vst.msk [vmem:[#allocation3 + $0x78] sm:$0xff] %vm367, 0.0
        %vm400 = vcmask 523264
        %401 = vst.msk [vmem:[#allocation4] sm:$0xff] %vm400, 0.0
        %402 = vst.msk [vmem:[#allocation4 + $0x8] sm:$0xff] %vm400, 0.0
        %403 = vst.msk [vmem:[#allocation4 + $0x10] sm:$0xff] %vm400, 0.0
        %404 = vst.msk [vmem:[#allocation4 + $0x18] sm:$0xff] %vm400, 0.0
        %405 = vst.msk [vmem:[#allocation4 + $0x20] sm:$0xff] %vm400, 0.0
        %406 = vst.msk [vmem:[#allocation4 + $0x28] sm:$0xff] %vm400, 0.0
        %407 = vst.msk [vmem:[#allocation4 + $0x30] sm:$0xff] %vm400, 0.0
        %408 = vst.msk [vmem:[#allocation4 + $0x38] sm:$0xff] %vm400, 0.0
        %409 = vst.msk [vmem:[#allocation4 + $0x40] sm:$0xff] %vm400, 0.0
        %410 = vst.msk [vmem:[#allocation4 + $0x48] sm:$0xff] %vm400, 0.0
        %411 = vst.msk [vmem:[#allocation4 + $0x50] sm:$0xff] %vm400, 0.0
        %412 = vst.msk [vmem:[#allocation4 + $0x58] sm:$0xff] %vm400, 0.0
        %413 = vst.msk [vmem:[#allocation4 + $0x60] sm:$0xff] %vm400, 0.0
        %414 = vst.msk [vmem:[#allocation4 + $0x68] sm:$0xff] %vm400, 0.0
        %415 = vst.msk [vmem:[#allocation4 + $0x70] sm:$0xff] %vm400, 0.0
        %416 = vst.msk [vmem:[#allocation4 + $0x78] sm:$0xff] %vm400, 0.0
      $region40: #{tpu_custom_call.1} parent=35 // pred_fallthru
        _
      %v417 = vld [vmem:[%s318] sm:$0xff]
      %v418 = vld [vmem:[%s318 + $0x8] sm:$0xff]
      %v419 = vld [vmem:[%s318 + $0x10] sm:$0xff]
      %v420 = vld [vmem:[%s318 + $0x18] sm:$0xff]
      %v421 = vld [vmem:[%s318 + $0x20] sm:$0xff]
      %v422 = vld [vmem:[%s318 + $0x28] sm:$0xff]
      %v423 = vld [vmem:[%s318 + $0x30] sm:$0xff]
      %v424 = vld [vmem:[%s318 + $0x38] sm:$0xff]
      %v425 = vld [vmem:[%s318 + $0x40] sm:$0xff]
      %v426 = vld [vmem:[%s318 + $0x48] sm:$0xff]
      %v427 = vld [vmem:[%s318 + $0x50] sm:$0xff]
      %v428 = vld [vmem:[%s318 + $0x58] sm:$0xff]
      %v429 = vld [vmem:[%s318 + $0x60] sm:$0xff]
      %v430 = vld [vmem:[%s318 + $0x68] sm:$0xff]
      %v431 = vld [vmem:[%s318 + $0x70] sm:$0xff]
      %v432 = vld [vmem:[%s318 + $0x78] sm:$0xff]
      %v433 = vld [vmem:[%s328] sm:$0xff]
      %v434 = vld [vmem:[%s328 + $0x8] sm:$0xff]
      %v435 = vld [vmem:[%s328 + $0x10] sm:$0xff]
      %v436 = vld [vmem:[%s328 + $0x18] sm:$0xff]
      %v437 = vld [vmem:[%s328 + $0x20] sm:$0xff]
      %v438 = vld [vmem:[%s328 + $0x28] sm:$0xff]
      %v439 = vld [vmem:[%s328 + $0x30] sm:$0xff]
      %v440 = vld [vmem:[%s328 + $0x38] sm:$0xff]
      %v441 = vld [vmem:[%s328 + $0x40] sm:$0xff]
      %v442 = vld [vmem:[%s328 + $0x48] sm:$0xff]
      %v443 = vld [vmem:[%s328 + $0x50] sm:$0xff]
      %v444 = vld [vmem:[%s328 + $0x58] sm:$0xff]
      %v445 = vld [vmem:[%s328 + $0x60] sm:$0xff]
      %v446 = vld [vmem:[%s328 + $0x68] sm:$0xff]
      %v447 = vld [vmem:[%s328 + $0x70] sm:$0xff]
      %v448 = vld [vmem:[%s328 + $0x78] sm:$0xff]
      %vm449 = vcmask 523264
      %v451 = vsel %vm449, %v417, 0
      %v454 = vsel %vm449, %v418, 0
      %v457 = vsel %vm449, %v419, 0
      %v460 = vsel %vm449, %v420, 0
      %v463 = vsel %vm449, %v421, 0
      %v466 = vsel %vm449, %v422, 0
      %v469 = vsel %vm449, %v423, 0
      %v472 = vsel %vm449, %v424, 0
      %v475 = vsel %vm449, %v425, 0
      %v478 = vsel %vm449, %v426, 0
      %v481 = vsel %vm449, %v427, 0
      %v484 = vsel %vm449, %v428, 0
      %v487 = vsel %vm449, %v429, 0
      %v490 = vsel %vm449, %v430, 0
      %v493 = vsel %vm449, %v431, 0
      %v496 = vsel %vm449, %v432, 0
      %v499 = vsel %vm449, %v433, 0
      %v502 = vsel %vm449, %v434, 0
      %v505 = vsel %vm449, %v435, 0
      %v508 = vsel %vm449, %v436, 0
      %v511 = vsel %vm449, %v437, 0
      %v514 = vsel %vm449, %v438, 0
      %v517 = vsel %vm449, %v439, 0
      %v520 = vsel %vm449, %v440, 0
      %v523 = vsel %vm449, %v441, 0
      %v526 = vsel %vm449, %v442, 0
      %v529 = vsel %vm449, %v443, 0
      %v532 = vsel %vm449, %v444, 0
      %v535 = vsel %vm449, %v445, 0
      %v538 = vsel %vm449, %v446, 0
      %v541 = vsel %vm449, %v447, 0
      %v544 = vsel %vm449, %v448, 0
      %546 = vmatprep.subr.mxu0 0.0
      %547 = vmatpush1.xpose.msra.mxu0 %v544
      %548 = vmatprep.subr.mxu0 0.0
      %549 = vmatpush1.xpose.msra.mxu0 %v541
      %550 = vmatprep.subr.mxu0 0.0
      %551 = vmatpush1.xpose.msra.mxu0 %v538
      %552 = vmatprep.subr.mxu0 0.0
      %553 = vmatpush1.xpose.msra.mxu0 %v535
      %554 = vmatprep.subr.mxu0 0.0
      %555 = vmatpush1.xpose.msra.mxu0 %v532
      %556 = vmatprep.subr.mxu0 0.0
      %557 = vmatpush1.xpose.msra.mxu0 %v529
      %558 = vmatprep.subr.mxu0 0.0
      %559 = vmatpush1.xpose.msra.mxu0 %v526
      %560 = vmatprep.subr.mxu0 0.0
      %561 = vmatpush1.xpose.msra.mxu0 %v523
      %562 = vmatprep.subr.mxu0 0.0
      %563 = vmatpush1.xpose.msra.mxu0 %v520
      %564 = vmatprep.subr.mxu0 0.0
      %565 = vmatpush1.xpose.msra.mxu0 %v517
      %566 = vmatprep.subr.mxu0 0.0
      %567 = vmatpush1.xpose.msra.mxu0 %v514
      %568 = vmatprep.subr.mxu0 0.0
      %569 = vmatpush1.xpose.msra.mxu0 %v511
      %570 = vmatprep.subr.mxu0 0.0
      %571 = vmatpush1.xpose.msra.mxu0 %v508
      %572 = vmatprep.subr.mxu0 0.0
      %573 = vmatpush1.xpose.msra.mxu0 %v505
      %574 = vmatprep.subr.mxu0 0.0
      %575 = vmatpush1.xpose.msra.mxu0 %v502
      %576 = vmatprep.subr.mxu0 0.0
      %577 = vmatpush1.xpose.msra.mxu0 %v499
      %578 = vmatprep.subr.mxu0 0.0
      %579 = vmatpush2.xpose.msra.mxu0 0.0
      %580 = vmatprep.subr.mxu0 0.0
      %581 = vmatpush2.xpose.msra.mxu0 0.0
      %582 = vmatprep.subr.mxu0 0.0
      %583 = vmatpush2.xpose.msra.mxu0 0.0
      %584 = vmatprep.subr.mxu0 0.0
      %585 = vmatpush2.xpose.msra.mxu0 0.0
      %586 = vmatprep.subr.mxu0 0.0
      %587 = vmatpush2.xpose.msra.mxu0 0.0
      %588 = vmatprep.subr.mxu0 0.0
      %589 = vmatpush2.xpose.msra.mxu0 0.0
      %590 = vmatprep.subr.mxu0 0.0
      %591 = vmatpush2.xpose.msra.mxu0 0.0
      %592 = vmatprep.subr.mxu0 0.0
      %593 = vmatpush2.xpose.msra.mxu0 0.0
      %594 = vmatprep.subr.mxu0 0.0
      %595 = vmatpush2.xpose.msra.mxu0 0.0
      %596 = vmatprep.subr.mxu0 0.0
      %597 = vmatpush2.xpose.msra.mxu0 0.0
      %598 = vmatprep.subr.mxu0 0.0
      %599 = vmatpush2.xpose.msra.mxu0 0.0
      %600 = vmatprep.subr.mxu0 0.0
      %601 = vmatpush2.xpose.msra.mxu0 0.0
      %602 = vmatprep.subr.mxu0 0.0
      %603 = vmatpush2.xpose.msra.mxu0 0.0
      %604 = vmatprep.subr.mxu0 0.0
      %605 = vmatpush2.xpose.msra.mxu0 0.0
      %606 = vmatprep.subr.mxu0 0.0
      %607 = vmatpush2.xpose.msra.mxu0 0.0
      %608 = vmatprep.subr.mxu0 0.0
      %609 = vmatpush2.xpose.msra.mxu0 0.0
      %610 = vmatprep.mubr.f32.mxu0 0.0
      %611 = vmatmul.mubr.f32.gmra.mxu0 %v451
      %v612 = vpop.f32.mrf.mxu0
      %v613 = vadd.f32 0.0, %v612
      %v614 = vpop.f32.mrf.mxu0
      %615 = vmatprep.mubr.f32.mxu0 0.0
      %616 = vmatmul.mubr.f32.gmra.mxu0 %v454
      %v617 = vpop.f32.mrf.mxu0
      %v618 = vadd.f32 0.0, %v617
      %v619 = vpop.f32.mrf.mxu0
      %620 = vmatprep.mubr.f32.mxu0 0.0
      %621 = vmatmul.mubr.f32.gmra.mxu0 %v457
      %v622 = vpop.f32.mrf.mxu0
      %v623 = vadd.f32 0.0, %v622
      %v624 = vpop.f32.mrf.mxu0
      %625 = vmatprep.mubr.f32.mxu0 0.0
      %626 = vmatmul.mubr.f32.gmra.mxu0 %v460
      %v627 = vpop.f32.mrf.mxu0
      %v628 = vadd.f32 0.0, %v627
      %v629 = vpop.f32.mrf.mxu0
      %630 = vmatprep.mubr.f32.mxu0 0.0
      %631 = vmatmul.mubr.f32.gmra.mxu0 %v463
      %v632 = vpop.f32.mrf.mxu0
      %v633 = vadd.f32 0.0, %v632
      %v634 = vpop.f32.mrf.mxu0
      %635 = vmatprep.mubr.f32.mxu0 0.0
      %636 = vmatmul.mubr.f32.gmra.mxu0 %v466
      %v637 = vpop.f32.mrf.mxu0
      %v638 = vadd.f32 0.0, %v637
      %v639 = vpop.f32.mrf.mxu0
      %640 = vmatprep.mubr.f32.mxu0 0.0
      %641 = vmatmul.mubr.f32.gmra.mxu0 %v469
      %v642 = vpop.f32.mrf.mxu0
      %v643 = vadd.f32 0.0, %v642
      %v644 = vpop.f32.mrf.mxu0
      %645 = vmatprep.mubr.f32.mxu0 0.0
      %646 = vmatmul.mubr.f32.gmra.mxu0 %v472
      %v647 = vpop.f32.mrf.mxu0
      %v648 = vadd.f32 0.0, %v647
      %v649 = vpop.f32.mrf.mxu0
      %650 = vmatprep.mubr.f32.mxu0 0.0
      %651 = vmatmul.mubr.f32.gmra.mxu0 %v475
      %v652 = vpop.f32.mrf.mxu0
      %v653 = vadd.f32 0.0, %v652
      %v654 = vpop.f32.mrf.mxu0
      %655 = vmatprep.mubr.f32.mxu0 0.0
      %656 = vmatmul.mubr.f32.gmra.mxu0 %v478
      %v657 = vpop.f32.mrf.mxu0
      %v658 = vadd.f32 0.0, %v657
      %v659 = vpop.f32.mrf.mxu0
      %660 = vmatprep.mubr.f32.mxu0 0.0
      %661 = vmatmul.mubr.f32.gmra.mxu0 %v481
      %v662 = vpop.f32.mrf.mxu0
      %v663 = vadd.f32 0.0, %v662
      %v664 = vpop.f32.mrf.mxu0
      %665 = vmatprep.mubr.f32.mxu0 0.0
      %666 = vmatmul.mubr.f32.gmra.mxu0 %v484
      %v667 = vpop.f32.mrf.mxu0
      %v668 = vadd.f32 0.0, %v667
      %v669 = vpop.f32.mrf.mxu0
      %670 = vmatprep.mubr.f32.mxu0 0.0
      %671 = vmatmul.mubr.f32.gmra.mxu0 %v487
      %v672 = vpop.f32.mrf.mxu0
      %v673 = vadd.f32 0.0, %v672
      %v674 = vpop.f32.mrf.mxu0
      %675 = vmatprep.mubr.f32.mxu0 0.0
      %676 = vmatmul.mubr.f32.gmra.mxu0 %v490
      %v677 = vpop.f32.mrf.mxu0
      %v678 = vadd.f32 0.0, %v677
      %v679 = vpop.f32.mrf.mxu0
      %680 = vmatprep.mubr.f32.mxu0 0.0
      %681 = vmatmul.mubr.f32.gmra.mxu0 %v493
      %v682 = vpop.f32.mrf.mxu0
      %v683 = vadd.f32 0.0, %v682
      %v684 = vpop.f32.mrf.mxu0
      %685 = vmatprep.mubr.f32.mxu0 0.0
      %686 = vmatmul.mubr.f32.gmra.mxu0 %v496
      %v687 = vpop.f32.mrf.mxu0
      %v688 = vadd.f32 0.0, %v687
      %v689 = vpop.f32.mrf.mxu0
      %690 = vdwg.mxu0
      %v691 = vmul.f32 %v613, 0.125
      %v692 = vmul.f32 %v618, 0.125
      %v693 = vmul.f32 %v623, 0.125
      %v694 = vmul.f32 %v628, 0.125
      %v695 = vmul.f32 %v633, 0.125
      %v696 = vmul.f32 %v638, 0.125
      %v697 = vmul.f32 %v643, 0.125
      %v698 = vmul.f32 %v648, 0.125
      %v699 = vmul.f32 %v653, 0.125
      %v700 = vmul.f32 %v658, 0.125
      %v701 = vmul.f32 %v663, 0.125
      %v702 = vmul.f32 %v668, 0.125
      %v703 = vmul.f32 %v673, 0.125
      %v704 = vmul.f32 %v678, 0.125
      %v705 = vmul.f32 %v683, 0.125
      %v706 = vmul.f32 %v688, 0.125
      %v707 = vld [vmem:[%s351] sm:$0xff]
      %v708 = vld [vmem:[%s351 + $0x8] sm:$0xff]
      %v709 = vld [vmem:[%s351 + $0x10] sm:$0xff]
      %v710 = vld [vmem:[%s351 + $0x18] sm:$0xff]
      %v711 = vld [vmem:[%s351 + $0x20] sm:$0xff]
      %v712 = vld [vmem:[%s351 + $0x28] sm:$0xff]
      %v713 = vld [vmem:[%s351 + $0x30] sm:$0xff]
      %v714 = vld [vmem:[%s351 + $0x38] sm:$0xff]
      %v715 = vld [vmem:[%s351 + $0x40] sm:$0xff]
      %v716 = vld [vmem:[%s351 + $0x48] sm:$0xff]
      %v717 = vld [vmem:[%s351 + $0x50] sm:$0xff]
      %v718 = vld [vmem:[%s351 + $0x58] sm:$0xff]
      %v719 = vld [vmem:[%s351 + $0x60] sm:$0xff]
      %v720 = vld [vmem:[%s351 + $0x68] sm:$0xff]
      %v721 = vld [vmem:[%s351 + $0x70] sm:$0xff]
      %v722 = vld [vmem:[%s351 + $0x78] sm:$0xff]
      %vm723 = vcmp.ne.s32.totalorder %v707, 0
      %vm724 = vcmp.ne.s32.totalorder %v708, 0
      %vm725 = vcmp.ne.s32.totalorder %v709, 0
      %vm726 = vcmp.ne.s32.totalorder %v710, 0
      %vm727 = vcmp.ne.s32.totalorder %v711, 0
      %vm728 = vcmp.ne.s32.totalorder %v712, 0
      %vm729 = vcmp.ne.s32.totalorder %v713, 0
      %vm730 = vcmp.ne.s32.totalorder %v714, 0
      %vm731 = vcmp.ne.s32.totalorder %v715, 0
      %vm732 = vcmp.ne.s32.totalorder %v716, 0
      %vm733 = vcmp.ne.s32.totalorder %v717, 0
      %vm734 = vcmp.ne.s32.totalorder %v718, 0
      %vm735 = vcmp.ne.s32.totalorder %v719, 0
      %vm736 = vcmp.ne.s32.totalorder %v720, 0
      %vm737 = vcmp.ne.s32.totalorder %v721, 0
      %vm738 = vcmp.ne.s32.totalorder %v722, 0
      %v739 = vsel %vm723, 1e-09, %v691
      %v740 = vsel %vm724, 1e-09, %v692
      %v741 = vsel %vm725, 1e-09, %v693
      %v742 = vsel %vm726, 1e-09, %v694
      %v743 = vsel %vm727, 1e-09, %v695
      %v744 = vsel %vm728, 1e-09, %v696
      %v745 = vsel %vm729, 1e-09, %v697
      %v746 = vsel %vm730, 1e-09, %v698
      %v747 = vsel %vm731, 1e-09, %v699
      %v748 = vsel %vm732, 1e-09, %v700
      %v749 = vsel %vm733, 1e-09, %v701
      %v750 = vsel %vm734, 1e-09, %v702
      %v751 = vsel %vm735, 1e-09, %v703
      %v752 = vsel %vm736, 1e-09, %v704
      %v753 = vsel %vm737, 1e-09, %v705
      %v754 = vsel %vm738, 1e-09, %v706
      %v755 = vld [vmem:[#allocation2] sm:$0xff]
      %v756 = vld [vmem:[#allocation2 + $0x8] sm:$0xff]
      %v757 = vld [vmem:[#allocation2 + $0x10] sm:$0xff]
      %v758 = vld [vmem:[#allocation2 + $0x18] sm:$0xff]
      %v759 = vld [vmem:[#allocation2 + $0x20] sm:$0xff]
      %v760 = vld [vmem:[#allocation2 + $0x28] sm:$0xff]
      %v761 = vld [vmem:[#allocation2 + $0x30] sm:$0xff]
      %v762 = vld [vmem:[#allocation2 + $0x38] sm:$0xff]
      %v763 = vld [vmem:[#allocation2 + $0x40] sm:$0xff]
      %v764 = vld [vmem:[#allocation2 + $0x48] sm:$0xff]
      %v765 = vld [vmem:[#allocation2 + $0x50] sm:$0xff]
      %v766 = vld [vmem:[#allocation2 + $0x58] sm:$0xff]
      %v767 = vld [vmem:[#allocation2 + $0x60] sm:$0xff]
      %v768 = vld [vmem:[#allocation2 + $0x68] sm:$0xff]
      %v769 = vld [vmem:[#allocation2 + $0x70] sm:$0xff]
      %v770 = vld [vmem:[#allocation2 + $0x78] sm:$0xff]
      %771 = vmax.xlane.f32.xlu0 %v739
      %v772 = vpop.xlane.xlu0 %771
      %773 = vmax.xlane.f32.xlu0 %v740
      %v774 = vpop.xlane.xlu0 %773
      %775 = vmax.xlane.f32.xlu0 %v741
      %v776 = vpop.xlane.xlu0 %775
      %777 = vmax.xlane.f32.xlu0 %v742
      %v778 = vpop.xlane.xlu0 %777
      %779 = vmax.xlane.f32.xlu0 %v743
      %v780 = vpop.xlane.xlu0 %779
      %781 = vmax.xlane.f32.xlu0 %v744
      %v782 = vpop.xlane.xlu0 %781
      %783 = vmax.xlane.f32.xlu0 %v745
      %v784 = vpop.xlane.xlu0 %783
      %785 = vmax.xlane.f32.xlu0 %v746
      %v786 = vpop.xlane.xlu0 %785
      %787 = vmax.xlane.f32.xlu0 %v747
      %v788 = vpop.xlane.xlu0 %787
      %789 = vmax.xlane.f32.xlu0 %v748
      %v790 = vpop.xlane.xlu0 %789
      %791 = vmax.xlane.f32.xlu0 %v749
      %v792 = vpop.xlane.xlu0 %791
      %793 = vmax.xlane.f32.xlu0 %v750
      %v794 = vpop.xlane.xlu0 %793
      %795 = vmax.xlane.f32.xlu0 %v751
      %v796 = vpop.xlane.xlu0 %795
      %797 = vmax.xlane.f32.xlu0 %v752
      %v798 = vpop.xlane.xlu0 %797
      %799 = vmax.xlane.f32.xlu0 %v753
      %v800 = vpop.xlane.xlu0 %799
      %801 = vmax.xlane.f32.xlu0 %v754
      %v802 = vpop.xlane.xlu0 %801
      %v803 = vmax.f32 %v755, %v772
      %v804 = vmax.f32 %v756, %v774
      %v805 = vmax.f32 %v757, %v776
      %v806 = vmax.f32 %v758, %v778
      %v807 = vmax.f32 %v759, %v780
      %v808 = vmax.f32 %v760, %v782
      %v809 = vmax.f32 %v761, %v784
      %v810 = vmax.f32 %v762, %v786
      %v811 = vmax.f32 %v763, %v788
      %v812 = vmax.f32 %v764, %v790
      %v813 = vmax.f32 %v765, %v792
      %v814 = vmax.f32 %v766, %v794
      %v815 = vmax.f32 %v767, %v796
      %v816 = vmax.f32 %v768, %v798
      %v817 = vmax.f32 %v769, %v800
      %v818 = vmax.f32 %v770, %v802
      %v819 = vsub.f32 %v755, %v803
      %v820 = vsub.f32 %v756, %v804
      %v821 = vsub.f32 %v757, %v805
      %v822 = vsub.f32 %v758, %v806
      %v823 = vsub.f32 %v759, %v807
      %v824 = vsub.f32 %v760, %v808
      %v825 = vsub.f32 %v761, %v809
      %v826 = vsub.f32 %v762, %v810
      %v827 = vsub.f32 %v763, %v811
      %v828 = vsub.f32 %v764, %v812
      %v829 = vsub.f32 %v765, %v813
      %v830 = vsub.f32 %v766, %v814
      %v831 = vsub.f32 %v767, %v815
      %v832 = vsub.f32 %v768, %v816
      %v833 = vsub.f32 %v769, %v817
      %v834 = vsub.f32 %v770, %v818
      %v835 = vmul.f32 %v819, 1.442695
      %v836 = vpow.pop %v835
      %v837 = vmul.f32 %v820, 1.442695
      %v838 = vpow.pop %v837
      %v839 = vmul.f32 %v821, 1.442695
      %v840 = vpow.pop %v839
      %v841 = vmul.f32 %v822, 1.442695
      %v842 = vpow.pop %v841
      %v843 = vmul.f32 %v823, 1.442695
      %v844 = vpow.pop %v843
      %v845 = vmul.f32 %v824, 1.442695
      %v846 = vpow.pop %v845
      %v847 = vmul.f32 %v825, 1.442695
      %v848 = vpow.pop %v847
      %v849 = vmul.f32 %v826, 1.442695
      %v850 = vpow.pop %v849
      %v851 = vmul.f32 %v827, 1.442695
      %v852 = vpow.pop %v851
      %v853 = vmul.f32 %v828, 1.442695
      %v854 = vpow.pop %v853
      %v855 = vmul.f32 %v829, 1.442695
      %v856 = vpow.pop %v855
      %v857 = vmul.f32 %v830, 1.442695
      %v858 = vpow.pop %v857
      %v859 = vmul.f32 %v831, 1.442695
      %v860 = vpow.pop %v859
      %v861 = vmul.f32 %v832, 1.442695
      %v862 = vpow.pop %v861
      %v863 = vmul.f32 %v833, 1.442695
      %v864 = vpow.pop %v863
      %v865 = vmul.f32 %v834, 1.442695
      %v866 = vpow.pop %v865
      %868 = vset.pattern.permute.xlu0 0
      %869 = vperm.xlu0 %868, %v803
      %v870 = vpop.permute.xlu0 %869
      %873 = vset.pattern.permute.xlu0 0
      %874 = vperm.xlu0 %873, %v804
      %v875 = vpop.permute.xlu0 %874
      %878 = vset.pattern.permute.xlu0 0
      %879 = vperm.xlu0 %878, %v805
      %v880 = vpop.permute.xlu0 %879
      %883 = vset.pattern.permute.xlu0 0
      %884 = vperm.xlu0 %883, %v806
      %v885 = vpop.permute.xlu0 %884
      %888 = vset.pattern.permute.xlu0 0
      %889 = vperm.xlu0 %888, %v807
      %v890 = vpop.permute.xlu0 %889
      %893 = vset.pattern.permute.xlu0 0
      %894 = vperm.xlu0 %893, %v808
      %v895 = vpop.permute.xlu0 %894
      %898 = vset.pattern.permute.xlu0 0
      %899 = vperm.xlu0 %898, %v809
      %v900 = vpop.permute.xlu0 %899
      %903 = vset.pattern.permute.xlu0 0
      %904 = vperm.xlu0 %903, %v810
      %v905 = vpop.permute.xlu0 %904
      %908 = vset.pattern.permute.xlu0 0
      %909 = vperm.xlu0 %908, %v811
      %v910 = vpop.permute.xlu0 %909
      %913 = vset.pattern.permute.xlu0 0
      %914 = vperm.xlu0 %913, %v812
      %v915 = vpop.permute.xlu0 %914
      %918 = vset.pattern.permute.xlu0 0
      %919 = vperm.xlu0 %918, %v813
      %v920 = vpop.permute.xlu0 %919
      %923 = vset.pattern.permute.xlu0 0
      %924 = vperm.xlu0 %923, %v814
      %v925 = vpop.permute.xlu0 %924
      %928 = vset.pattern.permute.xlu0 0
      %929 = vperm.xlu0 %928, %v815
      %v930 = vpop.permute.xlu0 %929
      %933 = vset.pattern.permute.xlu0 0
      %934 = vperm.xlu0 %933, %v816
      %v935 = vpop.permute.xlu0 %934
      %938 = vset.pattern.permute.xlu0 0
      %939 = vperm.xlu0 %938, %v817
      %v940 = vpop.permute.xlu0 %939
      %943 = vset.pattern.permute.xlu0 0
      %944 = vperm.xlu0 %943, %v818
      %v945 = vpop.permute.xlu0 %944
      %v947 = vsub.f32 %v739, %v870
      %v948 = vsub.f32 %v740, %v875
      %v949 = vsub.f32 %v741, %v880
      %v950 = vsub.f32 %v742, %v885
      %v951 = vsub.f32 %v743, %v890
      %v952 = vsub.f32 %v744, %v895
      %v953 = vsub.f32 %v745, %v900
      %v954 = vsub.f32 %v746, %v905
      %v955 = vsub.f32 %v747, %v910
      %v956 = vsub.f32 %v748, %v915
      %v957 = vsub.f32 %v749, %v920
      %v958 = vsub.f32 %v750, %v925
      %v959 = vsub.f32 %v751, %v930
      %v960 = vsub.f32 %v752, %v935
      %v961 = vsub.f32 %v753, %v940
      %v962 = vsub.f32 %v754, %v945
      %v963 = vmul.f32 %v947, 1.442695
      %v964 = vpow.pop %v963
      %v965 = vmul.f32 %v948, 1.442695
      %v966 = vpow.pop %v965
      %v967 = vmul.f32 %v949, 1.442695
      %v968 = vpow.pop %v967
      %v969 = vmul.f32 %v950, 1.442695
      %v970 = vpow.pop %v969
      %v971 = vmul.f32 %v951, 1.442695
      %v972 = vpow.pop %v971
      %v973 = vmul.f32 %v952, 1.442695
      %v974 = vpow.pop %v973
      %v975 = vmul.f32 %v953, 1.442695
      %v976 = vpow.pop %v975
      %v977 = vmul.f32 %v954, 1.442695
      %v978 = vpow.pop %v977
      %v979 = vmul.f32 %v955, 1.442695
      %v980 = vpow.pop %v979
      %v981 = vmul.f32 %v956, 1.442695
      %v982 = vpow.pop %v981
      %v983 = vmul.f32 %v957, 1.442695
      %v984 = vpow.pop %v983
      %v985 = vmul.f32 %v958, 1.442695
      %v986 = vpow.pop %v985
      %v987 = vmul.f32 %v959, 1.442695
      %v988 = vpow.pop %v987
      %v989 = vmul.f32 %v960, 1.442695
      %v990 = vpow.pop %v989
      %v991 = vmul.f32 %v961, 1.442695
      %v992 = vpow.pop %v991
      %v993 = vmul.f32 %v962, 1.442695
      %v994 = vpow.pop %v993
      %v995 = vld [vmem:[#allocation3] sm:$0xff]
      %v996 = vld [vmem:[#allocation3 + $0x8] sm:$0xff]
      %v997 = vld [vmem:[#allocation3 + $0x10] sm:$0xff]
      %v998 = vld [vmem:[#allocation3 + $0x18] sm:$0xff]
      %v999 = vld [vmem:[#allocation3 + $0x20] sm:$0xff]
      %v1000 = vld [vmem:[#allocation3 + $0x28] sm:$0xff]
      %v1001 = vld [vmem:[#allocation3 + $0x30] sm:$0xff]
      %v1002 = vld [vmem:[#allocation3 + $0x38] sm:$0xff]
      %v1003 = vld [vmem:[#allocation3 + $0x40] sm:$0xff]
      %v1004 = vld [vmem:[#allocation3 + $0x48] sm:$0xff]
      %v1005 = vld [vmem:[#allocation3 + $0x50] sm:$0xff]
      %v1006 = vld [vmem:[#allocation3 + $0x58] sm:$0xff]
      %v1007 = vld [vmem:[#allocation3 + $0x60] sm:$0xff]
      %v1008 = vld [vmem:[#allocation3 + $0x68] sm:$0xff]
      %v1009 = vld [vmem:[#allocation3 + $0x70] sm:$0xff]
      %v1010 = vld [vmem:[#allocation3 + $0x78] sm:$0xff]
      %v1011 = vmul.f32 %v836, %v995
      %v1012 = vmul.f32 %v838, %v996
      %v1013 = vmul.f32 %v840, %v997
      %v1014 = vmul.f32 %v842, %v998
      %v1015 = vmul.f32 %v844, %v999
      %v1016 = vmul.f32 %v846, %v1000
      %v1017 = vmul.f32 %v848, %v1001
      %v1018 = vmul.f32 %v850, %v1002
      %v1019 = vmul.f32 %v852, %v1003
      %v1020 = vmul.f32 %v854, %v1004
      %v1021 = vmul.f32 %v856, %v1005
      %v1022 = vmul.f32 %v858, %v1006
      %v1023 = vmul.f32 %v860, %v1007
      %v1024 = vmul.f32 %v862, %v1008
      %v1025 = vmul.f32 %v864, %v1009
      %v1026 = vmul.f32 %v866, %v1010
      %1027 = vadd.xlane.f32.xlu0 %v964
      %v1028 = vpop.xlane.xlu0 %1027
      %1029 = vadd.xlane.f32.xlu0 %v966
      %v1030 = vpop.xlane.xlu0 %1029
      %1031 = vadd.xlane.f32.xlu0 %v968
      %v1032 = vpop.xlane.xlu0 %1031
      %1033 = vadd.xlane.f32.xlu0 %v970
      %v1034 = vpop.xlane.xlu0 %1033
      %1035 = vadd.xlane.f32.xlu0 %v972
      %v1036 = vpop.xlane.xlu0 %1035
      %1037 = vadd.xlane.f32.xlu0 %v974
      %v1038 = vpop.xlane.xlu0 %1037
      %1039 = vadd.xlane.f32.xlu0 %v976
      %v1040 = vpop.xlane.xlu0 %1039
      %1041 = vadd.xlane.f32.xlu0 %v978
      %v1042 = vpop.xlane.xlu0 %1041
      %1043 = vadd.xlane.f32.xlu0 %v980
      %v1044 = vpop.xlane.xlu0 %1043
      %1045 = vadd.xlane.f32.xlu0 %v982
      %v1046 = vpop.xlane.xlu0 %1045
      %1047 = vadd.xlane.f32.xlu0 %v984
      %v1048 = vpop.xlane.xlu0 %1047
      %1049 = vadd.xlane.f32.xlu0 %v986
      %v1050 = vpop.xlane.xlu0 %1049
      %1051 = vadd.xlane.f32.xlu0 %v988
      %v1052 = vpop.xlane.xlu0 %1051
      %1053 = vadd.xlane.f32.xlu0 %v990
      %v1054 = vpop.xlane.xlu0 %1053
      %1055 = vadd.xlane.f32.xlu0 %v992
      %v1056 = vpop.xlane.xlu0 %1055
      %1057 = vadd.xlane.f32.xlu0 %v994
      %v1058 = vpop.xlane.xlu0 %1057
      %v1059 = vadd.f32 %v1011, %v1028
      %v1060 = vadd.f32 %v1012, %v1030
      %v1061 = vadd.f32 %v1013, %v1032
      %v1062 = vadd.f32 %v1014, %v1034
      %v1063 = vadd.f32 %v1015, %v1036
      %v1064 = vadd.f32 %v1016, %v1038
      %v1065 = vadd.f32 %v1017, %v1040
      %v1066 = vadd.f32 %v1018, %v1042
      %v1067 = vadd.f32 %v1019, %v1044
      %v1068 = vadd.f32 %v1020, %v1046
      %v1069 = vadd.f32 %v1021, %v1048
      %v1070 = vadd.f32 %v1022, %v1050
      %v1071 = vadd.f32 %v1023, %v1052
      %v1072 = vadd.f32 %v1024, %v1054
      %v1073 = vadd.f32 %v1025, %v1056
      %v1074 = vadd.f32 %v1026, %v1058
      %vm1075 = vcmask 7168
      %1076 = vst.msk [vmem:[#allocation3] sm:$0xff] %vm1075, %v1059
      %1077 = vst.msk [vmem:[#allocation3 + $0x8] sm:$0xff] %vm1075, %v1060
      %1078 = vst.msk [vmem:[#allocation3 + $0x10] sm:$0xff] %vm1075, %v1061
      %1079 = vst.msk [vmem:[#allocation3 + $0x18] sm:$0xff] %vm1075, %v1062
      %1080 = vst.msk [vmem:[#allocation3 + $0x20] sm:$0xff] %vm1075, %v1063
      %1081 = vst.msk [vmem:[#allocation3 + $0x28] sm:$0xff] %vm1075, %v1064
      %1082 = vst.msk [vmem:[#allocation3 + $0x30] sm:$0xff] %vm1075, %v1065
      %1083 = vst.msk [vmem:[#allocation3 + $0x38] sm:$0xff] %vm1075, %v1066
      %1084 = vst.msk [vmem:[#allocation3 + $0x40] sm:$0xff] %vm1075, %v1067
      %1085 = vst.msk [vmem:[#allocation3 + $0x48] sm:$0xff] %vm1075, %v1068
      %1086 = vst.msk [vmem:[#allocation3 + $0x50] sm:$0xff] %vm1075, %v1069
      %1087 = vst.msk [vmem:[#allocation3 + $0x58] sm:$0xff] %vm1075, %v1070
      %1088 = vst.msk [vmem:[#allocation3 + $0x60] sm:$0xff] %vm1075, %v1071
      %1089 = vst.msk [vmem:[#allocation3 + $0x68] sm:$0xff] %vm1075, %v1072
      %1090 = vst.msk [vmem:[#allocation3 + $0x70] sm:$0xff] %vm1075, %v1073
      %1091 = vst.msk [vmem:[#allocation3 + $0x78] sm:$0xff] %vm1075, %v1074
      %v1092 = vld [vmem:[#allocation4] sm:$0xff]
      %v1093 = vld [vmem:[#allocation4 + $0x8] sm:$0xff]
      %v1094 = vld [vmem:[#allocation4 + $0x10] sm:$0xff]
      %v1095 = vld [vmem:[#allocation4 + $0x18] sm:$0xff]
      %v1096 = vld [vmem:[#allocation4 + $0x20] sm:$0xff]
      %v1097 = vld [vmem:[#allocation4 + $0x28] sm:$0xff]
      %v1098 = vld [vmem:[#allocation4 + $0x30] sm:$0xff]
      %v1099 = vld [vmem:[#allocation4 + $0x38] sm:$0xff]
      %v1100 = vld [vmem:[#allocation4 + $0x40] sm:$0xff]
      %v1101 = vld [vmem:[#allocation4 + $0x48] sm:$0xff]
      %v1102 = vld [vmem:[#allocation4 + $0x50] sm:$0xff]
      %v1103 = vld [vmem:[#allocation4 + $0x58] sm:$0xff]
      %v1104 = vld [vmem:[#allocation4 + $0x60] sm:$0xff]
      %v1105 = vld [vmem:[#allocation4 + $0x68] sm:$0xff]
      %v1106 = vld [vmem:[#allocation4 + $0x70] sm:$0xff]
      %v1107 = vld [vmem:[#allocation4 + $0x78] sm:$0xff]
      %1109 = vset.pattern.permute.xlu0 0
      %1110 = vperm.xlu0 %1109, %v836
      %v1111 = vpop.permute.xlu0 %1110
      %1114 = vset.pattern.permute.xlu0 0
      %1115 = vperm.xlu0 %1114, %v838
      %v1116 = vpop.permute.xlu0 %1115
      %1119 = vset.pattern.permute.xlu0 0
      %1120 = vperm.xlu0 %1119, %v840
      %v1121 = vpop.permute.xlu0 %1120
      %1124 = vset.pattern.permute.xlu0 0
      %1125 = vperm.xlu0 %1124, %v842
      %v1126 = vpop.permute.xlu0 %1125
      %1129 = vset.pattern.permute.xlu0 0
      %1130 = vperm.xlu0 %1129, %v844
      %v1131 = vpop.permute.xlu0 %1130
      %1134 = vset.pattern.permute.xlu0 0
      %1135 = vperm.xlu0 %1134, %v846
      %v1136 = vpop.permute.xlu0 %1135
      %1139 = vset.pattern.permute.xlu0 0
      %1140 = vperm.xlu0 %1139, %v848
      %v1141 = vpop.permute.xlu0 %1140
      %1144 = vset.pattern.permute.xlu0 0
      %1145 = vperm.xlu0 %1144, %v850
      %v1146 = vpop.permute.xlu0 %1145
      %1149 = vset.pattern.permute.xlu0 0
      %1150 = vperm.xlu0 %1149, %v852
      %v1151 = vpop.permute.xlu0 %1150
      %1154 = vset.pattern.permute.xlu0 0
      %1155 = vperm.xlu0 %1154, %v854
      %v1156 = vpop.permute.xlu0 %1155
      %1159 = vset.pattern.permute.xlu0 0
      %1160 = vperm.xlu0 %1159, %v856
      %v1161 = vpop.permute.xlu0 %1160
      %1164 = vset.pattern.permute.xlu0 0
      %1165 = vperm.xlu0 %1164, %v858
      %v1166 = vpop.permute.xlu0 %1165
      %1169 = vset.pattern.permute.xlu0 0
      %1170 = vperm.xlu0 %1169, %v860
      %v1171 = vpop.permute.xlu0 %1170
      %1174 = vset.pattern.permute.xlu0 0
      %1175 = vperm.xlu0 %1174, %v862
      %v1176 = vpop.permute.xlu0 %1175
      %1179 = vset.pattern.permute.xlu0 0
      %1180 = vperm.xlu0 %1179, %v864
      %v1181 = vpop.permute.xlu0 %1180
      %1184 = vset.pattern.permute.xlu0 0
      %1185 = vperm.xlu0 %1184, %v866
      %v1186 = vpop.permute.xlu0 %1185
      %v1188 = vmul.f32 %v1111, %v1092
      %v1189 = vmul.f32 %v1116, %v1093
      %v1190 = vmul.f32 %v1121, %v1094
      %v1191 = vmul.f32 %v1126, %v1095
      %v1192 = vmul.f32 %v1131, %v1096
      %v1193 = vmul.f32 %v1136, %v1097
      %v1194 = vmul.f32 %v1141, %v1098
      %v1195 = vmul.f32 %v1146, %v1099
      %v1196 = vmul.f32 %v1151, %v1100
      %v1197 = vmul.f32 %v1156, %v1101
      %v1198 = vmul.f32 %v1161, %v1102
      %v1199 = vmul.f32 %v1166, %v1103
      %v1200 = vmul.f32 %v1171, %v1104
      %v1201 = vmul.f32 %v1176, %v1105
      %v1202 = vmul.f32 %v1181, %v1106
      %v1203 = vmul.f32 %v1186, %v1107
      %v1204 = vld [vmem:[%s338] sm:$0xff]
      %v1205 = vld [vmem:[%s338 + $0x8] sm:$0xff]
      %v1206 = vld [vmem:[%s338 + $0x10] sm:$0xff]
      %v1207 = vld [vmem:[%s338 + $0x18] sm:$0xff]
      %v1208 = vld [vmem:[%s338 + $0x20] sm:$0xff]
      %v1209 = vld [vmem:[%s338 + $0x28] sm:$0xff]
      %v1210 = vld [vmem:[%s338 + $0x30] sm:$0xff]
      %v1211 = vld [vmem:[%s338 + $0x38] sm:$0xff]
      %v1212 = vld [vmem:[%s338 + $0x40] sm:$0xff]
      %v1213 = vld [vmem:[%s338 + $0x48] sm:$0xff]
      %v1214 = vld [vmem:[%s338 + $0x50] sm:$0xff]
      %v1215 = vld [vmem:[%s338 + $0x58] sm:$0xff]
      %v1216 = vld [vmem:[%s338 + $0x60] sm:$0xff]
      %v1217 = vld [vmem:[%s338 + $0x68] sm:$0xff]
      %v1218 = vld [vmem:[%s338 + $0x70] sm:$0xff]
      %v1219 = vld [vmem:[%s338 + $0x78] sm:$0xff]
      %1220 = vmatprep.subr.mxu0 0.0
      %1221 = vmatpush1.msra.mxu0 %v1219
      %1222 = vmatprep.subr.mxu0 0.0
      %1223 = vmatpush1.msra.mxu0 %v1218
      %1224 = vmatprep.subr.mxu0 0.0
      %1225 = vmatpush1.msra.mxu0 %v1217
      %1226 = vmatprep.subr.mxu0 0.0
      %1227 = vmatpush1.msra.mxu0 %v1216
      %1228 = vmatprep.subr.mxu0 0.0
      %1229 = vmatpush1.msra.mxu0 %v1215
      %1230 = vmatprep.subr.mxu0 0.0
      %1231 = vmatpush1.msra.mxu0 %v1214
      %1232 = vmatprep.subr.mxu0 0.0
      %1233 = vmatpush1.msra.mxu0 %v1213
      %1234 = vmatprep.subr.mxu0 0.0
      %1235 = vmatpush1.msra.mxu0 %v1212
      %1236 = vmatprep.subr.mxu0 0.0
      %1237 = vmatpush1.msra.mxu0 %v1211
      %1238 = vmatprep.subr.mxu0 0.0
      %1239 = vmatpush1.msra.mxu0 %v1210
      %1240 = vmatprep.subr.mxu0 0.0
      %1241 = vmatpush1.msra.mxu0 %v1209
      %1242 = vmatprep.subr.mxu0 0.0
      %1243 = vmatpush1.msra.mxu0 %v1208
      %1244 = vmatprep.subr.mxu0 0.0
      %1245 = vmatpush1.msra.mxu0 %v1207
      %1246 = vmatprep.subr.mxu0 0.0
      %1247 = vmatpush1.msra.mxu0 %v1206
      %1248 = vmatprep.subr.mxu0 0.0
      %1249 = vmatpush1.msra.mxu0 %v1205
      %1250 = vmatprep.subr.mxu0 0.0
      %1251 = vmatpush1.msra.mxu0 %v1204
      %1252 = vmatprep.subr.mxu0 0.0
      %1253 = vmatpush2.msra.mxu0 0.0
      %1254 = vmatprep.subr.mxu0 0.0
      %1255 = vmatpush2.msra.mxu0 0.0
      %1256 = vmatprep.subr.mxu0 0.0
      %1257 = vmatpush2.msra.mxu0 0.0
      %1258 = vmatprep.subr.mxu0 0.0
      %1259 = vmatpush2.msra.mxu0 0.0
      %1260 = vmatprep.subr.mxu0 0.0
      %1261 = vmatpush2.msra.mxu0 0.0
      %1262 = vmatprep.subr.mxu0 0.0
      %1263 = vmatpush2.msra.mxu0 0.0
      %1264 = vmatprep.subr.mxu0 0.0
      %1265 = vmatpush2.msra.mxu0 0.0
      %1266 = vmatprep.subr.mxu0 0.0
      %1267 = vmatpush2.msra.mxu0 0.0
      %1268 = vmatprep.subr.mxu0 0.0
      %1269 = vmatpush2.msra.mxu0 0.0
      %1270 = vmatprep.subr.mxu0 0.0
      %1271 = vmatpush2.msra.mxu0 0.0
      %1272 = vmatprep.subr.mxu0 0.0
      %1273 = vmatpush2.msra.mxu0 0.0
      %1274 = vmatprep.subr.mxu0 0.0
      %1275 = vmatpush2.msra.mxu0 0.0
      %1276 = vmatprep.subr.mxu0 0.0
      %1277 = vmatpush2.msra.mxu0 0.0
      %1278 = vmatprep.subr.mxu0 0.0
      %1279 = vmatpush2.msra.mxu0 0.0
      %1280 = vmatprep.subr.mxu0 0.0
      %1281 = vmatpush2.msra.mxu0 0.0
      %1282 = vmatprep.subr.mxu0 0.0
      %1283 = vmatpush2.msra.mxu0 0.0
      %1284 = vmatprep.mubr.f32.mxu0 0.0
      %1285 = vmatmul.mubr.f32.gmra.mxu0 %v964
      %v1286 = vpop.f32.mrf.mxu0
      %v1287 = vadd.f32 0.0, %v1286
      %v1288 = vpop.f32.mrf.mxu0
      %1289 = vmatprep.mubr.f32.mxu0 0.0
      %1290 = vmatmul.mubr.f32.gmra.mxu0 %v966
      %v1291 = vpop.f32.mrf.mxu0
      %v1292 = vadd.f32 0.0, %v1291
      %v1293 = vpop.f32.mrf.mxu0
      %1294 = vmatprep.mubr.f32.mxu0 0.0
      %1295 = vmatmul.mubr.f32.gmra.mxu0 %v968
      %v1296 = vpop.f32.mrf.mxu0
      %v1297 = vadd.f32 0.0, %v1296
      %v1298 = vpop.f32.mrf.mxu0
      %1299 = vmatprep.mubr.f32.mxu0 0.0
      %1300 = vmatmul.mubr.f32.gmra.mxu0 %v970
      %v1301 = vpop.f32.mrf.mxu0
      %v1302 = vadd.f32 0.0, %v1301
      %v1303 = vpop.f32.mrf.mxu0
      %1304 = vmatprep.mubr.f32.mxu0 0.0
      %1305 = vmatmul.mubr.f32.gmra.mxu0 %v972
      %v1306 = vpop.f32.mrf.mxu0
      %v1307 = vadd.f32 0.0, %v1306
      %v1308 = vpop.f32.mrf.mxu0
      %1309 = vmatprep.mubr.f32.mxu0 0.0
      %1310 = vmatmul.mubr.f32.gmra.mxu0 %v974
      %v1311 = vpop.f32.mrf.mxu0
      %v1312 = vadd.f32 0.0, %v1311
      %v1313 = vpop.f32.mrf.mxu0
      %1314 = vmatprep.mubr.f32.mxu0 0.0
      %1315 = vmatmul.mubr.f32.gmra.mxu0 %v976
      %v1316 = vpop.f32.mrf.mxu0
      %v1317 = vadd.f32 0.0, %v1316
      %v1318 = vpop.f32.mrf.mxu0
      %1319 = vmatprep.mubr.f32.mxu0 0.0
      %1320 = vmatmul.mubr.f32.gmra.mxu0 %v978
      %v1321 = vpop.f32.mrf.mxu0
      %v1322 = vadd.f32 0.0, %v1321
      %v1323 = vpop.f32.mrf.mxu0
      %1324 = vmatprep.mubr.f32.mxu0 0.0
      %1325 = vmatmul.mubr.f32.gmra.mxu0 %v980
      %v1326 = vpop.f32.mrf.mxu0
      %v1327 = vadd.f32 0.0, %v1326
      %v1328 = vpop.f32.mrf.mxu0
      %1329 = vmatprep.mubr.f32.mxu0 0.0
      %1330 = vmatmul.mubr.f32.gmra.mxu0 %v982
      %v1331 = vpop.f32.mrf.mxu0
      %v1332 = vadd.f32 0.0, %v1331
      %v1333 = vpop.f32.mrf.mxu0
      %1334 = vmatprep.mubr.f32.mxu0 0.0
      %1335 = vmatmul.mubr.f32.gmra.mxu0 %v984
      %v1336 = vpop.f32.mrf.mxu0
      %v1337 = vadd.f32 0.0, %v1336
      %v1338 = vpop.f32.mrf.mxu0
      %1339 = vmatprep.mubr.f32.mxu0 0.0
      %1340 = vmatmul.mubr.f32.gmra.mxu0 %v986
      %v1341 = vpop.f32.mrf.mxu0
      %v1342 = vadd.f32 0.0, %v1341
      %v1343 = vpop.f32.mrf.mxu0
      %1344 = vmatprep.mubr.f32.mxu0 0.0
      %1345 = vmatmul.mubr.f32.gmra.mxu0 %v988
      %v1346 = vpop.f32.mrf.mxu0
      %v1347 = vadd.f32 0.0, %v1346
      %v1348 = vpop.f32.mrf.mxu0
      %1349 = vmatprep.mubr.f32.mxu0 0.0
      %1350 = vmatmul.mubr.f32.gmra.mxu0 %v990
      %v1351 = vpop.f32.mrf.mxu0
      %v1352 = vadd.f32 0.0, %v1351
      %v1353 = vpop.f32.mrf.mxu0
      %1354 = vmatprep.mubr.f32.mxu0 0.0
      %1355 = vmatmul.mubr.f32.gmra.mxu0 %v992
      %v1356 = vpop.f32.mrf.mxu0
      %v1357 = vadd.f32 0.0, %v1356
      %v1358 = vpop.f32.mrf.mxu0
      %1359 = vmatprep.mubr.f32.mxu0 0.0
      %1360 = vmatmul.mubr.f32.gmra.mxu0 %v994
      %v1361 = vpop.f32.mrf.mxu0
      %v1362 = vadd.f32 0.0, %v1361
      %v1363 = vpop.f32.mrf.mxu0
      %1364 = vdwg.mxu0
      %v1365 = vadd.f32 %v1188, %v1287
      %v1366 = vadd.f32 %v1189, %v1292
      %v1367 = vadd.f32 %v1190, %v1297
      %v1368 = vadd.f32 %v1191, %v1302
      %v1369 = vadd.f32 %v1192, %v1307
      %v1370 = vadd.f32 %v1193, %v1312
      %v1371 = vadd.f32 %v1194, %v1317
      %v1372 = vadd.f32 %v1195, %v1322
      %v1373 = vadd.f32 %v1196, %v1327
      %v1374 = vadd.f32 %v1197, %v1332
      %v1375 = vadd.f32 %v1198, %v1337
      %v1376 = vadd.f32 %v1199, %v1342
      %v1377 = vadd.f32 %v1200, %v1347
      %v1378 = vadd.f32 %v1201, %v1352
      %v1379 = vadd.f32 %v1202, %v1357
      %v1380 = vadd.f32 %v1203, %v1362
      %1381 = vst.msk [vmem:[#allocation4] sm:$0xff] %vm449, %v1365
      %1382 = vst.msk [vmem:[#allocation4 + $0x8] sm:$0xff] %vm449, %v1366
      %1383 = vst.msk [vmem:[#allocation4 + $0x10] sm:$0xff] %vm449, %v1367
      %1384 = vst.msk [vmem:[#allocation4 + $0x18] sm:$0xff] %vm449, %v1368
      %1385 = vst.msk [vmem:[#allocation4 + $0x20] sm:$0xff] %vm449, %v1369
      %1386 = vst.msk [vmem:[#allocation4 + $0x28] sm:$0xff] %vm449, %v1370
      %1387 = vst.msk [vmem:[#allocation4 + $0x30] sm:$0xff] %vm449, %v1371
      %1388 = vst.msk [vmem:[#allocation4 + $0x38] sm:$0xff] %vm449, %v1372
      %1389 = vst.msk [vmem:[#allocation4 + $0x40] sm:$0xff] %vm449, %v1373
      %1390 = vst.msk [vmem:[#allocation4 + $0x48] sm:$0xff] %vm449, %v1374
      %1391 = vst.msk [vmem:[#allocation4 + $0x50] sm:$0xff] %vm449, %v1375
      %1392 = vst.msk [vmem:[#allocation4 + $0x58] sm:$0xff] %vm449, %v1376
      %1393 = vst.msk [vmem:[#allocation4 + $0x60] sm:$0xff] %vm449, %v1377
      %1394 = vst.msk [vmem:[#allocation4 + $0x68] sm:$0xff] %vm449, %v1378
      %1395 = vst.msk [vmem:[#allocation4 + $0x70] sm:$0xff] %vm449, %v1379
      %1396 = vst.msk [vmem:[#allocation4 + $0x78] sm:$0xff] %vm449, %v1380
      %1397 = vst.msk [vmem:[#allocation2] sm:$0xff] %vm1075, %v803
      %1398 = vst.msk [vmem:[#allocation2 + $0x8] sm:$0xff] %vm1075, %v804
      %1399 = vst.msk [vmem:[#allocation2 + $0x10] sm:$0xff] %vm1075, %v805
      %1400 = vst.msk [vmem:[#allocation2 + $0x18] sm:$0xff] %vm1075, %v806
      %1401 = vst.msk [vmem:[#allocation2 + $0x20] sm:$0xff] %vm1075, %v807
      %1402 = vst.msk [vmem:[#allocation2 + $0x28] sm:$0xff] %vm1075, %v808
      %1403 = vst.msk [vmem:[#allocation2 + $0x30] sm:$0xff] %vm1075, %v809
      %1404 = vst.msk [vmem:[#allocation2 + $0x38] sm:$0xff] %vm1075, %v810
      %1405 = vst.msk [vmem:[#allocation2 + $0x40] sm:$0xff] %vm1075, %v811
      %1406 = vst.msk [vmem:[#allocation2 + $0x48] sm:$0xff] %vm1075, %v812
      %1407 = vst.msk [vmem:[#allocation2 + $0x50] sm:$0xff] %vm1075, %v813
      %1408 = vst.msk [vmem:[#allocation2 + $0x58] sm:$0xff] %vm1075, %v814
      %1409 = vst.msk [vmem:[#allocation2 + $0x60] sm:$0xff] %vm1075, %v815
      %1410 = vst.msk [vmem:[#allocation2 + $0x68] sm:$0xff] %vm1075, %v816
      %1411 = vst.msk [vmem:[#allocation2 + $0x70] sm:$0xff] %vm1075, %v817
      %1412 = vst.msk [vmem:[#allocation2 + $0x78] sm:$0xff] %vm1075, %v818
      // Predicated region
      $region41: #{tpu_custom_call.1} parent=35 // pred_check
        %p1413 = pneg %p363
      $region42: #{tpu_custom_call.1} parent=35 // pred_check_branch
        %1415 = sbr.rel (%p1413) target = $region44
      $region43: #{tpu_custom_call.1} parent=35 // pred_region
        %v1416 = vld [vmem:[#allocation4] sm:$0xff]
        %v1417 = vld [vmem:[#allocation4 + $0x8] sm:$0xff]
        %v1418 = vld [vmem:[#allocation4 + $0x10] sm:$0xff]
        %v1419 = vld [vmem:[#allocation4 + $0x18] sm:$0xff]
        %v1420 = vld [vmem:[#allocation4 + $0x20] sm:$0xff]
        %v1421 = vld [vmem:[#allocation4 + $0x28] sm:$0xff]
        %v1422 = vld [vmem:[#allocation4 + $0x30] sm:$0xff]
        %v1423 = vld [vmem:[#allocation4 + $0x38] sm:$0xff]
        %v1424 = vld [vmem:[#allocation4 + $0x40] sm:$0xff]
        %v1425 = vld [vmem:[#allocation4 + $0x48] sm:$0xff]
        %v1426 = vld [vmem:[#allocation4 + $0x50] sm:$0xff]
        %v1427 = vld [vmem:[#allocation4 + $0x58] sm:$0xff]
        %v1428 = vld [vmem:[#allocation4 + $0x60] sm:$0xff]
        %v1429 = vld [vmem:[#allocation4 + $0x68] sm:$0xff]
        %v1430 = vld [vmem:[#allocation4 + $0x70] sm:$0xff]
        %v1431 = vld [vmem:[#allocation4 + $0x78] sm:$0xff]
        %v1432 = vld [vmem:[#allocation3] sm:$0xff]
        %v1433 = vld [vmem:[#allocation3 + $0x8] sm:$0xff]
        %v1434 = vld [vmem:[#allocation3 + $0x10] sm:$0xff]
        %v1435 = vld [vmem:[#allocation3 + $0x18] sm:$0xff]
        %v1436 = vld [vmem:[#allocation3 + $0x20] sm:$0xff]
        %v1437 = vld [vmem:[#allocation3 + $0x28] sm:$0xff]
        %v1438 = vld [vmem:[#allocation3 + $0x30] sm:$0xff]
        %v1439 = vld [vmem:[#allocation3 + $0x38] sm:$0xff]
        %v1440 = vld [vmem:[#allocation3 + $0x40] sm:$0xff]
        %v1441 = vld [vmem:[#allocation3 + $0x48] sm:$0xff]
        %v1442 = vld [vmem:[#allocation3 + $0x50] sm:$0xff]
        %v1443 = vld [vmem:[#allocation3 + $0x58] sm:$0xff]
        %v1444 = vld [vmem:[#allocation3 + $0x60] sm:$0xff]
        %v1445 = vld [vmem:[#allocation3 + $0x68] sm:$0xff]
        %v1446 = vld [vmem:[#allocation3 + $0x70] sm:$0xff]
        %v1447 = vld [vmem:[#allocation3 + $0x78] sm:$0xff]
        %1449 = vset.pattern.permute.xlu0 0
        %1450 = vperm.xlu0 %1449, %v1432
        %v1451 = vpop.permute.xlu0 %1450
        %1454 = vset.pattern.permute.xlu0 0
        %1455 = vperm.xlu0 %1454, %v1433
        %v1456 = vpop.permute.xlu0 %1455
        %1459 = vset.pattern.permute.xlu0 0
        %1460 = vperm.xlu0 %1459, %v1434
        %v1461 = vpop.permute.xlu0 %1460
        %1464 = vset.pattern.permute.xlu0 0
        %1465 = vperm.xlu0 %1464, %v1435
        %v1466 = vpop.permute.xlu0 %1465
        %1469 = vset.pattern.permute.xlu0 0
        %1470 = vperm.xlu0 %1469, %v1436
        %v1471 = vpop.permute.xlu0 %1470
        %1474 = vset.pattern.permute.xlu0 0
        %1475 = vperm.xlu0 %1474, %v1437
        %v1476 = vpop.permute.xlu0 %1475
        %1479 = vset.pattern.permute.xlu0 0
        %1480 = vperm.xlu0 %1479, %v1438
        %v1481 = vpop.permute.xlu0 %1480
        %1484 = vset.pattern.permute.xlu0 0
        %1485 = vperm.xlu0 %1484, %v1439
        %v1486 = vpop.permute.xlu0 %1485
        %1489 = vset.pattern.permute.xlu0 0
        %1490 = vperm.xlu0 %1489, %v1440
        %v1491 = vpop.permute.xlu0 %1490
        %1494 = vset.pattern.permute.xlu0 0
        %1495 = vperm.xlu0 %1494, %v1441
        %v1496 = vpop.permute.xlu0 %1495
        %1499 = vset.pattern.permute.xlu0 0
        %1500 = vperm.xlu0 %1499, %v1442
        %v1501 = vpop.permute.xlu0 %1500
        %1504 = vset.pattern.permute.xlu0 0
        %1505 = vperm.xlu0 %1504, %v1443
        %v1506 = vpop.permute.xlu0 %1505
        %1509 = vset.pattern.permute.xlu0 0
        %1510 = vperm.xlu0 %1509, %v1444
        %v1511 = vpop.permute.xlu0 %1510
        %1514 = vset.pattern.permute.xlu0 0
        %1515 = vperm.xlu0 %1514, %v1445
        %v1516 = vpop.permute.xlu0 %1515
        %1519 = vset.pattern.permute.xlu0 0
        %1520 = vperm.xlu0 %1519, %v1446
        %v1521 = vpop.permute.xlu0 %1520
        %1524 = vset.pattern.permute.xlu0 0
        %1525 = vperm.xlu0 %1524, %v1447
        %v1526 = vpop.permute.xlu0 %1525
        %v1528 = vrcp.pop %v1451
        %v1529 = vmul.f32 %v1416, %v1528
        %v1530 = vrcp.pop %v1456
        %v1531 = vmul.f32 %v1417, %v1530
        %v1532 = vrcp.pop %v1461
        %v1533 = vmul.f32 %v1418, %v1532
        %v1534 = vrcp.pop %v1466
        %v1535 = vmul.f32 %v1419, %v1534
        %v1536 = vrcp.pop %v1471
        %v1537 = vmul.f32 %v1420, %v1536
        %v1538 = vrcp.pop %v1476
        %v1539 = vmul.f32 %v1421, %v1538
        %v1540 = vrcp.pop %v1481
        %v1541 = vmul.f32 %v1422, %v1540
        %v1542 = vrcp.pop %v1486
        %v1543 = vmul.f32 %v1423, %v1542
        %v1544 = vrcp.pop %v1491
        %v1545 = vmul.f32 %v1424, %v1544
        %v1546 = vrcp.pop %v1496
        %v1547 = vmul.f32 %v1425, %v1546
        %v1548 = vrcp.pop %v1501
        %v1549 = vmul.f32 %v1426, %v1548
        %v1550 = vrcp.pop %v1506
        %v1551 = vmul.f32 %v1427, %v1550
        %v1552 = vrcp.pop %v1511
        %v1553 = vmul.f32 %v1428, %v1552
        %v1554 = vrcp.pop %v1516
        %v1555 = vmul.f32 %v1429, %v1554
        %v1556 = vrcp.pop %v1521
        %v1557 = vmul.f32 %v1430, %v1556
        %v1558 = vrcp.pop %v1526
        %v1559 = vmul.f32 %v1431, %v1558
        %1560 = vst.msk [vmem:[%s361] sm:$0xff] %vm449, %v1529
        %1561 = vst.msk [vmem:[%s361 + $0x8] sm:$0xff] %vm449, %v1531
        %1562 = vst.msk [vmem:[%s361 + $0x10] sm:$0xff] %vm449, %v1533
        %1563 = vst.msk [vmem:[%s361 + $0x18] sm:$0xff] %vm449, %v1535
        %1564 = vst.msk [vmem:[%s361 + $0x20] sm:$0xff] %vm449, %v1537
        %1565 = vst.msk [vmem:[%s361 + $0x28] sm:$0xff] %vm449, %v1539
        %1566 = vst.msk [vmem:[%s361 + $0x30] sm:$0xff] %vm449, %v1541
        %1567 = vst.msk [vmem:[%s361 + $0x38] sm:$0xff] %vm449, %v1543
        %1568 = vst.msk [vmem:[%s361 + $0x40] sm:$0xff] %vm449, %v1545
        %1569 = vst.msk [vmem:[%s361 + $0x48] sm:$0xff] %vm449, %v1547
        %1570 = vst.msk [vmem:[%s361 + $0x50] sm:$0xff] %vm449, %v1549
        %1571 = vst.msk [vmem:[%s361 + $0x58] sm:$0xff] %vm449, %v1551
        %1572 = vst.msk [vmem:[%s361 + $0x60] sm:$0xff] %vm449, %v1553
        %1573 = vst.msk [vmem:[%s361 + $0x68] sm:$0xff] %vm449, %v1555
        %1574 = vst.msk [vmem:[%s361 + $0x70] sm:$0xff] %vm449, %v1557
        %1575 = vst.msk [vmem:[%s361 + $0x78] sm:$0xff] %vm449, %v1559
      $region44: #{tpu_custom_call.1} parent=35 // pred_fallthru
        _
      %s1576 = smul.u32 16, %s21
      %p1577 = scmp.lt.s32.totalorder %s20, 7
      %s1578 = scalar_select %p1577, %s20, 7
      %p1579 = scmp.lt.s32.totalorder %s1576, 15
      %s1580 = scalar_select %p1579, %s1576, 15
      %s1581 = smul.addr %s1578, 16
      %s1582 = sadd.s32 %s1580, %s1581
      %s1583 = smul.addr %s1582, 8
      %s1584 = scalar_lea.vmem %s4, %s1583
      // Predicated region
      $region45: #{tpu_custom_call.1} parent=35 // pred_check
        %p1585 = pneg %p168
      $region46: #{tpu_custom_call.1} parent=35 // pred_check_branch
        %1587 = sbr.rel (%p1585) target = $region48
      $region47: #{tpu_custom_call.1} parent=35 // pred_region
        %s1588 = smul.u32 16, %s21
      $region48: #{tpu_custom_call.1} parent=35 // pred_fallthru
        _
    $region36: #{tpu_custom_call.1} parent=5 // pred_fallthru
      _
    %p1589 = scmp.le.s32.totalorder 2, %s10
    // Predicated region
    $region49: #{tpu_custom_call.1} parent=5 // pred_check
      %p1590 = pneg %p1589
    $region50: #{tpu_custom_call.1} parent=5 // pred_check_branch
      %1592 = sbr.rel (%p1590) target = $region52
    $region51: #{tpu_custom_call.1} parent=5 // pred_region
      %s1593 = ssub.s32 %s10, 2
      // Predicated region
      $region53: #{tpu_custom_call.1} parent=51 // pred_check
        %p1594 = pneg %p174
      $region54: #{tpu_custom_call.1} parent=51 // pred_check_branch
        %1596 = sbr.rel (%p1594) target = $region56
      $region55: #{tpu_custom_call.1} parent=51 // pred_region
        %s1597 = smul.u32 16, %s24
        %p1598 = scmp.lt.s32.totalorder %s23, 7
        %s1599 = scalar_select %p1598, %s23, 7
        %p1600 = scmp.lt.s32.totalorder %s1597, 15
        %s1601 = scalar_select %p1600, %s1597, 15
        %s1602 = smul.addr %s1599, 16
        %s1603 = sadd.s32 %s1601, %s1602
        %s1604 = smul.addr %s1603, 8
        %s1605 = scalar_lea.vmem %s4, %s1604
      $region56: #{tpu_custom_call.1} parent=51 // pred_fallthru
        _
    $region52: #{tpu_custom_call.1} parent=5 // pred_fallthru
      _
  $region6: #{tpu_custom_call.1} parent=0 // loop_footer
    %s14 = sadd.s32 1, %s10
  $region7: #{tpu_custom_call.1} parent=0 // loop_footer_branch
    %9 = sbr.rel target = $region3
  $region8: #{tpu_custom_call.1} parent=0 // loop_exit
    _

</llo_original>
